<compile_context>
chip_gen: v6e
topology: v6e:2x2x1
jax: 0.10.0
libtpu: 0.0.40
codegen_flags: <defaults>
</compile_context>

<pallas_src>
import functools

import jax
import jax.numpy as jnp
from jax.scipy.special import gammaln
from jax.experimental import pallas as pl
from jax.experimental.pallas import tpu as pltpu


# ----------------------------------------------------------------------------
# Dimensions (small, self-consistent with the module's forward pass)
# ----------------------------------------------------------------------------
B = 2      # n_trials
T = 8      # n_time_bins
N = 32     # n_neurons
L = 8      # latent dim
R = 4      # low-rank dim of K_y / K_b
U = 4      # input (u) dim
S = 4      # n_samples
# encoder output layout: [ k (L) | vec(K) packed r-major: column L + r*L + l ]
D_ENC = L + L * R          # 40
TB = T * B

_VMEM = pl.BlockSpec(memory_space=pltpu.MemorySpace.VMEM)


# ----------------------------------------------------------------------------
# Single fused kernel:
#   local_encoder -> backward message (shifted one step) -> diag(K K^T)
#   -> causal nonlinear diagonal filter (serial over T, only m carries)
#   -> (hoisted) sampling of S latents and Poisson ELL, vectorized over T and S.
# ----------------------------------------------------------------------------
# TODO(synk): xfads BackwardEncoderLRMvn backward-GRU recursion replaced by a
#             one-step linear, time-shifted backward message.
# TODO(synk): the full low-rank Woodbury covariance update of the xfads
#             nl_filter is approximated with its diagonal here.
def _fused_kernel(yin_ref, u_ref, y_ref, masks_ref, eps_ref,
                  Wl_ref, Wb_ref, A_ref, C_ref, vecp_ref,
                  z_ref, m_ref, scal_ref,
                  bs_scr, v_scr, kl_scr, *, n_samples):
    f32 = jnp.float32

    # ---- unpack packed small parameters (static ref slices) -----------------
    b_local = vecp_ref[0:1, :]                 # (1, D_ENC)
    b_back = vecp_ref[1:2, :]                  # (1, D_ENC)
    b_dyn = vecp_ref[2:3, 0:L]
    log_Q = vecp_ref[2:3, L:2 * L]
    log_Q0 = vecp_ref[2:3, 2 * L:3 * L]
    m0 = vecp_ref[2:3, 3 * L:4 * L]
    c_bias = vecp_ref[3:4, 0:N]
    Bu = vecp_ref[4:4 + U, 0:L]                # (U, L)
    A = A_ref[...]
    C = C_ref[...]
    ma = masks_ref[:, 0:1]                     # (TB, 1)  t_mask_a
    mb = masks_ref[:, 1:2]                     # (TB, 1)  t_mask_b

    # ---- fused encoders, vectorized over all T*B rows (off the serial path) -
    enc = jnp.dot(yin_ref[...], Wl_ref[...], preferred_element_type=f32) + b_local
    enc = ma * enc                                                     # (TB, D_ENC)
    back = jnp.dot(enc, Wb_ref[...], preferred_element_type=f32) + b_back
    # one-step backward shift in time (rows are t*B+b): message at t comes from
    # t+1, zero at t = T-1.  Done with two static-slice stores (no MXU, no roll
    # direction ambiguity), then masked by t_mask_b.
    bs_scr[0:(T - 1) * B, :] = back[B:, :]
    bs_scr[(T - 1) * B:TB, :] = jnp.zeros((B, D_ENC), f32)
    back = mb * bs_scr[...]                                            # (TB, D_ENC)

    comb = enc + back
    k_sum = comb[:, 0:L]                                               # k_y + k_b
    # diag(K_y K_y^T) + diag(K_b K_b^T): vec(K) is r-major, so the R groups are
    # contiguous lane blocks of width L — plain VPU adds, no selector matmul.
    sq = enc * enc + back * back
    diag = sq[:, L:2 * L]
    for r in range(1, R):
        diag = diag + sq[:, (1 + r) * L:(2 + r) * L]                   # (TB, L)
    # input drive u @ Bu, hoisted out of the recursion
    drive = jnp.dot(u_ref[...], Bu, preferred_element_type=f32)        # (TB, L)

    # ---- time-invariant filter quantities ------------------------------------
    Q = jax.nn.softplus(log_Q)
    Q0 = jax.nn.softplus(log_Q0)
    Jq, Jq0 = 1.0 / Q, 1.0 / Q0
    lQ, lQ0 = jnp.log(Q), jnp.log(Q0)

    # ---- causal filter recursion: only m_post carries state ------------------
    #   m_pred = tanh(m_{t-1} @ A + b_dyn) + u_t @ Bu     (m0 / Q0 at t == 0)
    #   J_post = J_pred + diag(K K^T);  m_post = (J_pred m_pred + k) / J_post
    m_prev = None
    for t in range(T):                       # fully unrolled, static slices
        sl = slice(t * B, (t + 1) * B)
        k_t, d_t, dr_t = k_sum[sl, :], diag[sl, :], drive[sl, :]
        if t == 0:
            m_pred = m0 + dr_t
            Jp, Qp, lQp = Jq0, Q0, lQ0
        else:
            m_pred = jnp.tanh(jnp.dot(m_prev, A, preferred_element_type=f32)
                              + b_dyn) + dr_t
            Jp, Qp, lQp = Jq, Q, lQ
        J_post = Jp + d_t
        v_post = 1.0 / J_post
        m_post = v_post * (Jp * m_pred + k_t)
        kl_t = 0.5 * (lQp - jnp.log(v_post)
                      + (v_post + (m_post - m_pred) ** 2) / Qp - 1.0)  # (B, L)
        m_ref[sl, :] = m_post
        v_scr[sl, :] = v_post
        kl_scr[sl, :] = kl_t
        m_prev = m_post

    # ---- hoisted sampling + Poisson ELL, vectorized over all T and S ---------
    m_all = m_ref[...]                                   # (TB, L)
    std_all = jnp.sqrt(v_scr[...])                       # (TB, L)
    z = m_all[None, :, :] + std_all[None, :, :] * eps_ref[...]   # (S, TB, L)
    z_ref[...] = z

    log_rate = jnp.dot(z.reshape(n_samples * TB, L), C,
                       preferred_element_type=f32) + c_bias            # (S*TB, N)
    exp_rate = jnp.exp(log_rate)
    lr_mean = jnp.mean(log_rate.reshape(n_samples, TB, N), axis=0)     # (TB, N)
    ex_mean = jnp.mean(exp_rate.reshape(n_samples, TB, N), axis=0)     # (TB, N)
    ell_n = y_ref[...] * lr_mean - ex_mean                             # (TB, N)

    scal_ref[:, 0:1] = jnp.sum(kl_scr[...], axis=-1, keepdims=True)    # KL per (t,b)
    scal_ref[:, 1:2] = jnp.sum(ell_n, axis=-1, keepdims=True)          # ELL per (t,b)


def fused_pallas(y_in, u_flat, y_flat, masks, eps, W_local, W_back, A, C, vecp,
                 n_samples):
    out_shape = [
        jax.ShapeDtypeStruct((n_samples, TB, L), jnp.float32),   # z samples
        jax.ShapeDtypeStruct((TB, L), jnp.float32),              # posterior mean
        jax.ShapeDtypeStruct((TB, 2), jnp.float32),              # [kl | ell] per (t,b)
    ]
    return pl.pallas_call(
        functools.partial(_fused_kernel, n_samples=n_samples),
        out_shape=out_shape,
        in_specs=[_VMEM] * 10,
        out_specs=[_VMEM] * 3,
        scratch_shapes=[pltpu.VMEM((TB, D_ENC), jnp.float32),    # shifted backward msg
                        pltpu.VMEM((TB, L), jnp.float32),        # v_post
                        pltpu.VMEM((TB, L), jnp.float32)],       # kl per dim
        cost_estimate=pl.CostEstimate(flops=140_000, transcendentals=4_000,
                                      bytes_accessed=24_000),
    )(y_in, u_flat, y_flat, masks, eps, W_local, W_back, A, C, vecp)


# ----------------------------------------------------------------------------
# Parameter init (deterministic, synthetic)
# ----------------------------------------------------------------------------
def init_params(key):
    ks = jax.random.split(key, 8)
    return {
        # local_encoder: N -> [k_y | vec(K_y)]
        "W_local": 0.1 * jax.random.normal(ks[0], (N, D_ENC), jnp.float32) / jnp.sqrt(N),
        "b_local": jnp.zeros((1, D_ENC), jnp.float32),
        # backward_encoder: [k | vec(K)] -> [k_b | vec(K_b)]
        "W_back": 0.1 * jax.random.normal(ks[1], (D_ENC, D_ENC), jnp.float32) / jnp.sqrt(D_ENC),
        "b_back": jnp.zeros((1, D_ENC), jnp.float32),
        # dynamics_mod
        "A": 0.9 * jnp.eye(L, dtype=jnp.float32)
             + 0.05 * jax.random.normal(ks[2], (L, L), jnp.float32),
        "b_dyn": jnp.zeros((1, L), jnp.float32),
        "log_Q": -1.0 * jnp.ones((1, L), jnp.float32),
        # initial_c_pdf (mean m0, variance softplus(log_Q0))
        "log_Q0": jnp.zeros((1, L), jnp.float32),
        "m0": 0.1 * jax.random.normal(ks[4], (1, L), jnp.float32),
        # nl_filter.input_latent_fn: U -> L
        "Bu": 0.1 * jax.random.normal(ks[3], (U, L), jnp.float32),
        # likelihood_pdf (Poisson readout)
        "C": 0.2 * jax.random.normal(ks[5], (L, N), jnp.float32) / jnp.sqrt(L),
        "c_bias": -0.5 * jnp.ones((1, N), jnp.float32),
    }


# ----------------------------------------------------------------------------
# Model forward (mirrors LowRankNonlinearStateSpaceModelWithInput.forward)
# ----------------------------------------------------------------------------
@functools.partial(jax.jit, static_argnames=("n_samples",))
def forward(params, y, u, key, n_samples=S,
            p_mask_y_in=0.0, p_mask_a=0.0, p_mask_b=0.0):
    k_mask_a, k_mask_b, k_mask_y, k_eps = jax.random.split(key, 4)

    # time-major layouts (one transpose each; everything downstream is time-major)
    y_tm = jnp.transpose(y, (1, 0, 2))   # (T, B, N)
    u_tm = jnp.transpose(u, (1, 0, 2))   # (T, B, U)

    # ---- fast_smooth_1_to_T --------------------------------------------------
    t_mask_a = jax.random.bernoulli(k_mask_a, 1.0 - p_mask_a, (T, B)).astype(jnp.float32)
    t_mask_b = jax.random.bernoulli(k_mask_b, 1.0 - p_mask_b, (T, B)).astype(jnp.float32)
    t_mask_y = jax.random.bernoulli(k_mask_y, 1.0 - p_mask_y_in, (T, B, N)).astype(jnp.float32)
    y_in = (t_mask_y * y_tm) / (1.0 - p_mask_y_in)   # NOTE: p_mask_y_in == 1.0 unsupported
    masks = jnp.stack([t_mask_a.reshape(TB), t_mask_b.reshape(TB)], axis=1)   # (TB, 2)

    eps = jax.random.normal(k_eps, (n_samples, TB, L), jnp.float32)

    # pack all small parameter vectors into one (8, D_ENC) slab (single input DMA)
    row2 = jnp.concatenate([params["b_dyn"], params["log_Q"], params["log_Q0"],
                            params["m0"], jnp.zeros((1, D_ENC - 4 * L), jnp.float32)], axis=1)
    row3 = jnp.concatenate([params["c_bias"],
                            jnp.zeros((1, D_ENC - N), jnp.float32)], axis=1)
    bu_rows = jnp.concatenate([params["Bu"],
                               jnp.zeros((U, D_ENC - L), jnp.float32)], axis=1)
    vecp = jnp.concatenate([params["b_local"], params["b_back"], row2, row3, bu_rows],
                           axis=0)                                    # (8, D_ENC)

    # single fused pallas_call: encoders + causal filter + sampling + ELL
    z_stl, m_tl, scal = fused_pallas(
        y_in.reshape(TB, N), u_tm.reshape(TB, U), y_tm.reshape(TB, N),
        masks, eps, params["W_local"], params["W_back"], params["A"], params["C"],
        vecp, n_samples)

    z_s = jnp.transpose(z_stl.reshape(n_samples, T, B, L), (0, 2, 1, 3))  # (S, B, T, L)
    m_s = jnp.transpose(m_tl.reshape(T, B, L), (1, 0, 2))                 # (B, T, L)
    kl = scal[:, 0].reshape(T, B).T                                       # (B, T)
    ell_k = scal[:, 1].reshape(T, B).T                                    # (B, T)

    # ---- likelihood_pdf.get_ell(y, z_s).mean(dim=0) ---------------------------
    # z-independent Poisson normalizer -lgamma(y+1) added here (no Mosaic lgamma)
    log_norm = -jnp.sum(gammaln(y + 1.0), axis=-1)                        # (B, T)
    ell = ell_k + log_norm

    # ---- loss ------------------------------------------------------------------
    loss = jnp.mean(jnp.sum(kl - ell, axis=-1))
    stats = {"kl": kl, "m_s": m_s, "ell": ell}
    return loss, z_s, stats


# ----------------------------------------------------------------------------
if __name__ == "__main__":
    key = jax.random.PRNGKey(0)
    k_param, k_y, k_u, k_fwd = jax.random.split(key, 4)

    params = init_params(k_param)
    y = jax.random.poisson(k_y, 2.0, (B, T, N)).astype(jnp.float32)
    u = jax.random.normal(k_u, (B, T, U), jnp.float32)

    loss, z_s, stats = forward(params, y, u, k_fwd, n_samples=S)
    jax.block_until_ready((loss, z_s, stats))

    assert z_s.shape == (S, B, T, L)
    assert stats["kl"].shape == (B, T)
    assert stats["ell"].shape == (B, T)
    assert stats["m_s"].shape == (B, T, L)
    assert jnp.isfinite(loss)
    print("KERNEL_OK")
</pallas_src>

<mosaic_0001>
module attributes {stable_mosaic.version = 11 : i64} {
  func.func @_fused_kernel(%arg0: memref<16x32xf32, #tpu.memory_space<vmem>>, %arg1: memref<16x4xf32, #tpu.memory_space<vmem>>, %arg2: memref<16x32xf32, #tpu.memory_space<vmem>>, %arg3: memref<16x2xf32, #tpu.memory_space<vmem>>, %arg4: memref<4x16x8xf32, #tpu.memory_space<vmem>>, %arg5: memref<32x40xf32, #tpu.memory_space<vmem>>, %arg6: memref<40x40xf32, #tpu.memory_space<vmem>>, %arg7: memref<8x8xf32, #tpu.memory_space<vmem>>, %arg8: memref<8x32xf32, #tpu.memory_space<vmem>>, %arg9: memref<8x40xf32, #tpu.memory_space<vmem>>, %arg10: memref<4x16x8xf32, #tpu.memory_space<vmem>>, %arg11: memref<16x8xf32, #tpu.memory_space<vmem>>, %arg12: memref<16x2xf32, #tpu.memory_space<vmem>>, %arg13: memref<16x40xf32, #tpu.memory_space<vmem>>, %arg14: memref<16x8xf32, #tpu.memory_space<vmem>>, %arg15: memref<16x8xf32, #tpu.memory_space<vmem>>) attributes {dimension_semantics = [], scalar_prefetch = 0 : i64, scratch_operands = 3 : i64, tpu.core_type = #tpu.core_type<tc>} {
    %c0 = arith.constant 0 : index
    %c0_0 = arith.constant 0 : index
    %0 = vector.load %arg9[%c0, %c0_0] : memref<8x40xf32, #tpu.memory_space<vmem>>, vector<1x40xf32>
    %c1 = arith.constant 1 : index
    %c0_1 = arith.constant 0 : index
    %1 = vector.load %arg9[%c1, %c0_1] : memref<8x40xf32, #tpu.memory_space<vmem>>, vector<1x40xf32>
    %c2 = arith.constant 2 : index
    %c0_2 = arith.constant 0 : index
    %2 = vector.load %arg9[%c2, %c0_2] : memref<8x40xf32, #tpu.memory_space<vmem>>, vector<1x8xf32>
    %c2_3 = arith.constant 2 : index
    %c8 = arith.constant 8 : index
    %3 = vector.load %arg9[%c2_3, %c8] : memref<8x40xf32, #tpu.memory_space<vmem>>, vector<1x8xf32>
    %c2_4 = arith.constant 2 : index
    %c16 = arith.constant 16 : index
    %4 = vector.load %arg9[%c2_4, %c16] : memref<8x40xf32, #tpu.memory_space<vmem>>, vector<1x8xf32>
    %c2_5 = arith.constant 2 : index
    %c24 = arith.constant 24 : index
    %5 = vector.load %arg9[%c2_5, %c24] : memref<8x40xf32, #tpu.memory_space<vmem>>, vector<1x8xf32>
    %c3 = arith.constant 3 : index
    %c0_6 = arith.constant 0 : index
    %6 = vector.load %arg9[%c3, %c0_6] : memref<8x40xf32, #tpu.memory_space<vmem>>, vector<1x32xf32>
    %c4 = arith.constant 4 : index
    %c0_7 = arith.constant 0 : index
    %7 = vector.load %arg9[%c4, %c0_7] : memref<8x40xf32, #tpu.memory_space<vmem>>, vector<4x8xf32>
    %c0_8 = arith.constant 0 : index
    %c0_9 = arith.constant 0 : index
    %8 = vector.load %arg7[%c0_8, %c0_9] : memref<8x8xf32, #tpu.memory_space<vmem>>, vector<8x8xf32>
    %c0_10 = arith.constant 0 : index
    %c0_11 = arith.constant 0 : index
    %9 = vector.load %arg8[%c0_10, %c0_11] : memref<8x32xf32, #tpu.memory_space<vmem>>, vector<8x32xf32>
    %c0_12 = arith.constant 0 : index
    %c0_13 = arith.constant 0 : index
    %10 = vector.load %arg3[%c0_12, %c0_13] : memref<16x2xf32, #tpu.memory_space<vmem>>, vector<16x1xf32>
    %c0_14 = arith.constant 0 : index
    %c1_15 = arith.constant 1 : index
    %11 = vector.load %arg3[%c0_14, %c1_15] : memref<16x2xf32, #tpu.memory_space<vmem>>, vector<16x1xf32>
    %c0_16 = arith.constant 0 : index
    %c0_17 = arith.constant 0 : index
    %12 = vector.load %arg0[%c0_16, %c0_17] : memref<16x32xf32, #tpu.memory_space<vmem>>, vector<16x32xf32>
    %c0_18 = arith.constant 0 : index
    %c0_19 = arith.constant 0 : index
    %13 = vector.load %arg5[%c0_18, %c0_19] : memref<32x40xf32, #tpu.memory_space<vmem>>, vector<32x40xf32>
    %cst = arith.constant dense<0.000000e+00> : vector<16x40xf32>
    %14 = tpu.matmul %12, %13, %cst {dimension_numbers = #tpu.dot_dimension_numbers<[1], [0], [0], [1], [0, 0, 1, 1], [], []>} : vector<16x32xf32>, vector<32x40xf32>, vector<16x40xf32> -> vector<16x40xf32>
    %15 = vector.broadcast %0 : vector<1x40xf32> to vector<16x40xf32>
    %16 = arith.addf %14, %15 : vector<16x40xf32>
    %17 = vector.broadcast %10 : vector<16x1xf32> to vector<16x40xf32>
    %18 = arith.mulf %17, %16 : vector<16x40xf32>
    %c0_20 = arith.constant 0 : index
    %c0_21 = arith.constant 0 : index
    %19 = vector.load %arg6[%c0_20, %c0_21] : memref<40x40xf32, #tpu.memory_space<vmem>>, vector<40x40xf32>
    %cst_22 = arith.constant dense<0.000000e+00> : vector<16x40xf32>
    %20 = tpu.matmul %18, %19, %cst_22 {dimension_numbers = #tpu.dot_dimension_numbers<[1], [0], [0], [1], [0, 0, 1, 1], [], []>} : vector<16x40xf32>, vector<40x40xf32>, vector<16x40xf32> -> vector<16x40xf32>
    %21 = vector.broadcast %1 : vector<1x40xf32> to vector<16x40xf32>
    %22 = arith.addf %20, %21 : vector<16x40xf32>
    %23 = vector.extract_strided_slice %22 {offsets = [2, 0], sizes = [14, 40], strides = [1, 1]} : vector<16x40xf32> to vector<14x40xf32>
    %c0_23 = arith.constant 0 : index
    %c0_24 = arith.constant 0 : index
    %24 = vector.load %arg13[%c0_23, %c0_24] : memref<16x40xf32, #tpu.memory_space<vmem>>, vector<14x40xf32>
    tpu.vector_store %arg13[%c0_23, %c0_24], %23 {strides = array<i32>} : memref<16x40xf32, #tpu.memory_space<vmem>>, vector<14x40xf32>,
    %cst_25 = arith.constant 0.000000e+00 : f32
    %25 = vector.broadcast %cst_25 : f32 to vector<2x40xf32>
    %c14 = arith.constant 14 : index
    %c0_26 = arith.constant 0 : index
    %26 = vector.load %arg13[%c14, %c0_26] : memref<16x40xf32, #tpu.memory_space<vmem>>, vector<2x40xf32>
    tpu.vector_store %arg13[%c14, %c0_26], %25 {strides = array<i32>} : memref<16x40xf32, #tpu.memory_space<vmem>>, vector<2x40xf32>,
    %c0_27 = arith.constant 0 : index
    %c0_28 = arith.constant 0 : index
    %27 = vector.load %arg13[%c0_27, %c0_28] : memref<16x40xf32, #tpu.memory_space<vmem>>, vector<16x40xf32>
    %28 = vector.broadcast %11 : vector<16x1xf32> to vector<16x40xf32>
    %29 = arith.mulf %28, %27 : vector<16x40xf32>
    %30 = arith.addf %18, %29 : vector<16x40xf32>
    %31 = vector.extract_strided_slice %30 {offsets = [0, 0], sizes = [16, 8], strides = [1, 1]} : vector<16x40xf32> to vector<16x8xf32>
    %32 = arith.mulf %18, %18 : vector<16x40xf32>
    %33 = arith.mulf %29, %29 : vector<16x40xf32>
    %34 = arith.addf %32, %33 : vector<16x40xf32>
    %35 = vector.extract_strided_slice %34 {offsets = [0, 8], sizes = [16, 8], strides = [1, 1]} : vector<16x40xf32> to vector<16x8xf32>
    %36 = vector.extract_strided_slice %34 {offsets = [0, 16], sizes = [16, 8], strides = [1, 1]} : vector<16x40xf32> to vector<16x8xf32>
    %37 = arith.addf %35, %36 : vector<16x8xf32>
    %38 = vector.extract_strided_slice %34 {offsets = [0, 24], sizes = [16, 8], strides = [1, 1]} : vector<16x40xf32> to vector<16x8xf32>
    %39 = arith.addf %37, %38 : vector<16x8xf32>
    %40 = vector.extract_strided_slice %34 {offsets = [0, 32], sizes = [16, 8], strides = [1, 1]} : vector<16x40xf32> to vector<16x8xf32>
    %41 = arith.addf %39, %40 : vector<16x8xf32>
    %c0_29 = arith.constant 0 : index
    %c0_30 = arith.constant 0 : index
    %42 = vector.load %arg1[%c0_29, %c0_30] : memref<16x4xf32, #tpu.memory_space<vmem>>, vector<16x4xf32>
    %cst_31 = arith.constant dense<0.000000e+00> : vector<16x8xf32>
    %43 = tpu.matmul %42, %7, %cst_31 {dimension_numbers = #tpu.dot_dimension_numbers<[1], [0], [0], [1], [0, 0, 1, 1], [], []>} : vector<16x4xf32>, vector<4x8xf32>, vector<16x8xf32> -> vector<16x8xf32>
    %cst_32 = arith.constant 0.000000e+00 : f32
    %44 = vector.broadcast %cst_32 : f32 to vector<1x8xf32>
    %45 = arith.maximumf %3, %44 : vector<1x8xf32>
    %46 = vector.broadcast %cst_32 : f32 to vector<1x8xf32>
    %47 = arith.subf %3, %46 : vector<1x8xf32>
    %48 = arith.cmpf one, %47, %47 : vector<1x8xf32>
    %49 = vector.broadcast %cst_32 : f32 to vector<1x8xf32>
    %50 = arith.addf %3, %49 : vector<1x8xf32>
    %51 = math.absf %47 : vector<1x8xf32>
    %cst_33 = arith.constant 0.000000e+00 : f32
    %52 = vector.broadcast %cst_33 : f32 to vector<1x8xf32>
    %53 = arith.subf %52, %51 : vector<1x8xf32>
    %54 = math.exp %53 : vector<1x8xf32>
    %55 = math.log1p %54 : vector<1x8xf32>
    %56 = arith.addf %45, %55 : vector<1x8xf32>
    %57 = arith.select %48, %50, %56 : vector<1x8xi1>, vector<1x8xf32>
    %cst_34 = arith.constant 0.000000e+00 : f32
    %58 = vector.broadcast %cst_34 : f32 to vector<1x8xf32>
    %59 = arith.maximumf %4, %58 : vector<1x8xf32>
    %60 = vector.broadcast %cst_34 : f32 to vector<1x8xf32>
    %61 = arith.subf %4, %60 : vector<1x8xf32>
    %62 = arith.cmpf one, %61, %61 : vector<1x8xf32>
    %63 = vector.broadcast %cst_34 : f32 to vector<1x8xf32>
    %64 = arith.addf %4, %63 : vector<1x8xf32>
    %65 = math.absf %61 : vector<1x8xf32>
    %cst_35 = arith.constant 0.000000e+00 : f32
    %66 = vector.broadcast %cst_35 : f32 to vector<1x8xf32>
    %67 = arith.subf %66, %65 : vector<1x8xf32>
    %68 = math.exp %67 : vector<1x8xf32>
    %69 = math.log1p %68 : vector<1x8xf32>
    %70 = arith.addf %59, %69 : vector<1x8xf32>
    %71 = arith.select %62, %64, %70 : vector<1x8xi1>, vector<1x8xf32>
    %cst_36 = arith.constant 1.000000e+00 : f32
    %72 = vector.broadcast %cst_36 : f32 to vector<1x8xf32>
    %73 = arith.divf %72, %57 : vector<1x8xf32>
    %cst_37 = arith.constant 1.000000e+00 : f32
    %74 = vector.broadcast %cst_37 : f32 to vector<1x8xf32>
    %75 = arith.divf %74, %71 : vector<1x8xf32>
    %76 = math.log %57 : vector<1x8xf32>
    %77 = math.log %71 : vector<1x8xf32>
    %78 = vector.extract_strided_slice %31 {offsets = [0, 0], sizes = [2, 8], strides = [1, 1]} : vector<16x8xf32> to vector<2x8xf32>
    %79 = vector.extract_strided_slice %41 {offsets = [0, 0], sizes = [2, 8], strides = [1, 1]} : vector<16x8xf32> to vector<2x8xf32>
    %80 = vector.extract_strided_slice %43 {offsets = [0, 0], sizes = [2, 8], strides = [1, 1]} : vector<16x8xf32> to vector<2x8xf32>
    %81 = vector.broadcast %5 : vector<1x8xf32> to vector<2x8xf32>
    %82 = arith.addf %81, %80 : vector<2x8xf32>
    %83 = vector.broadcast %75 : vector<1x8xf32> to vector<2x8xf32>
    %84 = arith.addf %83, %79 : vector<2x8xf32>
    %cst_38 = arith.constant 1.000000e+00 : f32
    %85 = vector.broadcast %cst_38 : f32 to vector<2x8xf32>
    %86 = arith.divf %85, %84 : vector<2x8xf32>
    %87 = vector.broadcast %75 : vector<1x8xf32> to vector<2x8xf32>
    %88 = arith.mulf %87, %82 : vector<2x8xf32>
    %89 = arith.addf %88, %78 : vector<2x8xf32>
    %90 = arith.mulf %86, %89 : vector<2x8xf32>
    %91 = math.log %86 : vector<2x8xf32>
    %92 = vector.broadcast %77 : vector<1x8xf32> to vector<2x8xf32>
    %93 = arith.subf %92, %91 : vector<2x8xf32>
    %94 = arith.subf %90, %82 : vector<2x8xf32>
    %95 = arith.mulf %94, %94 : vector<2x8xf32>
    %96 = arith.addf %86, %95 : vector<2x8xf32>
    %97 = vector.broadcast %71 : vector<1x8xf32> to vector<2x8xf32>
    %98 = arith.divf %96, %97 : vector<2x8xf32>
    %99 = arith.addf %93, %98 : vector<2x8xf32>
    %cst_39 = arith.constant 1.000000e+00 : f32
    %100 = vector.broadcast %cst_39 : f32 to vector<2x8xf32>
    %101 = arith.subf %99, %100 : vector<2x8xf32>
    %cst_40 = arith.constant 5.000000e-01 : f32
    %102 = vector.broadcast %cst_40 : f32 to vector<2x8xf32>
    %103 = arith.mulf %102, %101 : vector<2x8xf32>
    %c0_41 = arith.constant 0 : index
    %c0_42 = arith.constant 0 : index
    %104 = vector.load %arg11[%c0_41, %c0_42] : memref<16x8xf32, #tpu.memory_space<vmem>>, vector<2x8xf32>
    tpu.vector_store %arg11[%c0_41, %c0_42], %90 {strides = array<i32>} : memref<16x8xf32, #tpu.memory_space<vmem>>, vector<2x8xf32>,
    %c0_43 = arith.constant 0 : index
    %c0_44 = arith.constant 0 : index
    %105 = vector.load %arg14[%c0_43, %c0_44] : memref<16x8xf32, #tpu.memory_space<vmem>>, vector<2x8xf32>
    tpu.vector_store %arg14[%c0_43, %c0_44], %86 {strides = array<i32>} : memref<16x8xf32, #tpu.memory_space<vmem>>, vector<2x8xf32>,
    %c0_45 = arith.constant 0 : index
    %c0_46 = arith.constant 0 : index
    %106 = vector.load %arg15[%c0_45, %c0_46] : memref<16x8xf32, #tpu.memory_space<vmem>>, vector<2x8xf32>
    tpu.vector_store %arg15[%c0_45, %c0_46], %103 {strides = array<i32>} : memref<16x8xf32, #tpu.memory_space<vmem>>, vector<2x8xf32>,
    %107 = vector.extract_strided_slice %31 {offsets = [2, 0], sizes = [2, 8], strides = [1, 1]} : vector<16x8xf32> to vector<2x8xf32>
    %108 = vector.extract_strided_slice %41 {offsets = [2, 0], sizes = [2, 8], strides = [1, 1]} : vector<16x8xf32> to vector<2x8xf32>
    %109 = vector.extract_strided_slice %43 {offsets = [2, 0], sizes = [2, 8], strides = [1, 1]} : vector<16x8xf32> to vector<2x8xf32>
    %cst_47 = arith.constant dense<0.000000e+00> : vector<2x8xf32>
    %110 = tpu.matmul %90, %8, %cst_47 {dimension_numbers = #tpu.dot_dimension_numbers<[1], [0], [0], [1], [0, 0, 1, 1], [], []>} : vector<2x8xf32>, vector<8x8xf32>, vector<2x8xf32> -> vector<2x8xf32>
    %111 = vector.broadcast %2 : vector<1x8xf32> to vector<2x8xf32>
    %112 = arith.addf %110, %111 : vector<2x8xf32>
    %113 = math.tanh %112 : vector<2x8xf32>
    %114 = arith.addf %113, %109 : vector<2x8xf32>
    %115 = vector.broadcast %73 : vector<1x8xf32> to vector<2x8xf32>
    %116 = arith.addf %115, %108 : vector<2x8xf32>
    %cst_48 = arith.constant 1.000000e+00 : f32
    %117 = vector.broadcast %cst_48 : f32 to vector<2x8xf32>
    %118 = arith.divf %117, %116 : vector<2x8xf32>
    %119 = vector.broadcast %73 : vector<1x8xf32> to vector<2x8xf32>
    %120 = arith.mulf %119, %114 : vector<2x8xf32>
    %121 = arith.addf %120, %107 : vector<2x8xf32>
    %122 = arith.mulf %118, %121 : vector<2x8xf32>
    %123 = math.log %118 : vector<2x8xf32>
    %124 = vector.broadcast %76 : vector<1x8xf32> to vector<2x8xf32>
    %125 = arith.subf %124, %123 : vector<2x8xf32>
    %126 = arith.subf %122, %114 : vector<2x8xf32>
    %127 = arith.mulf %126, %126 : vector<2x8xf32>
    %128 = arith.addf %118, %127 : vector<2x8xf32>
    %129 = vector.broadcast %57 : vector<1x8xf32> to vector<2x8xf32>
    %130 = arith.divf %128, %129 : vector<2x8xf32>
    %131 = arith.addf %125, %130 : vector<2x8xf32>
    %cst_49 = arith.constant 1.000000e+00 : f32
    %132 = vector.broadcast %cst_49 : f32 to vector<2x8xf32>
    %133 = arith.subf %131, %132 : vector<2x8xf32>
    %cst_50 = arith.constant 5.000000e-01 : f32
    %134 = vector.broadcast %cst_50 : f32 to vector<2x8xf32>
    %135 = arith.mulf %134, %133 : vector<2x8xf32>
    %c2_51 = arith.constant 2 : index
    %c0_52 = arith.constant 0 : index
    %136 = vector.load %arg11[%c2_51, %c0_52] : memref<16x8xf32, #tpu.memory_space<vmem>>, vector<2x8xf32>
    tpu.vector_store %arg11[%c2_51, %c0_52], %122 {strides = array<i32>} : memref<16x8xf32, #tpu.memory_space<vmem>>, vector<2x8xf32>,
    %c2_53 = arith.constant 2 : index
    %c0_54 = arith.constant 0 : index
    %137 = vector.load %arg14[%c2_53, %c0_54] : memref<16x8xf32, #tpu.memory_space<vmem>>, vector<2x8xf32>
    tpu.vector_store %arg14[%c2_53, %c0_54], %118 {strides = array<i32>} : memref<16x8xf32, #tpu.memory_space<vmem>>, vector<2x8xf32>,
    %c2_55 = arith.constant 2 : index
    %c0_56 = arith.constant 0 : index
    %138 = vector.load %arg15[%c2_55, %c0_56] : memref<16x8xf32, #tpu.memory_space<vmem>>, vector<2x8xf32>
    tpu.vector_store %arg15[%c2_55, %c0_56], %135 {strides = array<i32>} : memref<16x8xf32, #tpu.memory_space<vmem>>, vector<2x8xf32>,
    %139 = vector.extract_strided_slice %31 {offsets = [4, 0], sizes = [2, 8], strides = [1, 1]} : vector<16x8xf32> to vector<2x8xf32>
    %140 = vector.extract_strided_slice %41 {offsets = [4, 0], sizes = [2, 8], strides = [1, 1]} : vector<16x8xf32> to vector<2x8xf32>
    %141 = vector.extract_strided_slice %43 {offsets = [4, 0], sizes = [2, 8], strides = [1, 1]} : vector<16x8xf32> to vector<2x8xf32>
    %cst_57 = arith.constant dense<0.000000e+00> : vector<2x8xf32>
    %142 = tpu.matmul %122, %8, %cst_57 {dimension_numbers = #tpu.dot_dimension_numbers<[1], [0], [0], [1], [0, 0, 1, 1], [], []>} : vector<2x8xf32>, vector<8x8xf32>, vector<2x8xf32> -> vector<2x8xf32>
    %143 = vector.broadcast %2 : vector<1x8xf32> to vector<2x8xf32>
    %144 = arith.addf %142, %143 : vector<2x8xf32>
    %145 = math.tanh %144 : vector<2x8xf32>
    %146 = arith.addf %145, %141 : vector<2x8xf32>
    %147 = vector.broadcast %73 : vector<1x8xf32> to vector<2x8xf32>
    %148 = arith.addf %147, %140 : vector<2x8xf32>
    %cst_58 = arith.constant 1.000000e+00 : f32
    %149 = vector.broadcast %cst_58 : f32 to vector<2x8xf32>
    %150 = arith.divf %149, %148 : vector<2x8xf32>
    %151 = vector.broadcast %73 : vector<1x8xf32> to vector<2x8xf32>
    %152 = arith.mulf %151, %146 : vector<2x8xf32>
    %153 = arith.addf %152, %139 : vector<2x8xf32>
    %154 = arith.mulf %150, %153 : vector<2x8xf32>
    %155 = math.log %150 : vector<2x8xf32>
    %156 = vector.broadcast %76 : vector<1x8xf32> to vector<2x8xf32>
    %157 = arith.subf %156, %155 : vector<2x8xf32>
    %158 = arith.subf %154, %146 : vector<2x8xf32>
    %159 = arith.mulf %158, %158 : vector<2x8xf32>
    %160 = arith.addf %150, %159 : vector<2x8xf32>
    %161 = vector.broadcast %57 : vector<1x8xf32> to vector<2x8xf32>
    %162 = arith.divf %160, %161 : vector<2x8xf32>
    %163 = arith.addf %157, %162 : vector<2x8xf32>
    %cst_59 = arith.constant 1.000000e+00 : f32
    %164 = vector.broadcast %cst_59 : f32 to vector<2x8xf32>
    %165 = arith.subf %163, %164 : vector<2x8xf32>
    %cst_60 = arith.constant 5.000000e-01 : f32
    %166 = vector.broadcast %cst_60 : f32 to vector<2x8xf32>
    %167 = arith.mulf %166, %165 : vector<2x8xf32>
    %c4_61 = arith.constant 4 : index
    %c0_62 = arith.constant 0 : index
    %168 = vector.load %arg11[%c4_61, %c0_62] : memref<16x8xf32, #tpu.memory_space<vmem>>, vector<2x8xf32>
    tpu.vector_store %arg11[%c4_61, %c0_62], %154 {strides = array<i32>} : memref<16x8xf32, #tpu.memory_space<vmem>>, vector<2x8xf32>,
    %c4_63 = arith.constant 4 : index
    %c0_64 = arith.constant 0 : index
    %169 = vector.load %arg14[%c4_63, %c0_64] : memref<16x8xf32, #tpu.memory_space<vmem>>, vector<2x8xf32>
    tpu.vector_store %arg14[%c4_63, %c0_64], %150 {strides = array<i32>} : memref<16x8xf32, #tpu.memory_space<vmem>>, vector<2x8xf32>,
    %c4_65 = arith.constant 4 : index
    %c0_66 = arith.constant 0 : index
    %170 = vector.load %arg15[%c4_65, %c0_66] : memref<16x8xf32, #tpu.memory_space<vmem>>, vector<2x8xf32>
    tpu.vector_store %arg15[%c4_65, %c0_66], %167 {strides = array<i32>} : memref<16x8xf32, #tpu.memory_space<vmem>>, vector<2x8xf32>,
    %171 = vector.extract_strided_slice %31 {offsets = [6, 0], sizes = [2, 8], strides = [1, 1]} : vector<16x8xf32> to vector<2x8xf32>
    %172 = vector.extract_strided_slice %41 {offsets = [6, 0], sizes = [2, 8], strides = [1, 1]} : vector<16x8xf32> to vector<2x8xf32>
    %173 = vector.extract_strided_slice %43 {offsets = [6, 0], sizes = [2, 8], strides = [1, 1]} : vector<16x8xf32> to vector<2x8xf32>
    %cst_67 = arith.constant dense<0.000000e+00> : vector<2x8xf32>
    %174 = tpu.matmul %154, %8, %cst_67 {dimension_numbers = #tpu.dot_dimension_numbers<[1], [0], [0], [1], [0, 0, 1, 1], [], []>} : vector<2x8xf32>, vector<8x8xf32>, vector<2x8xf32> -> vector<2x8xf32>
    %175 = vector.broadcast %2 : vector<1x8xf32> to vector<2x8xf32>
    %176 = arith.addf %174, %175 : vector<2x8xf32>
    %177 = math.tanh %176 : vector<2x8xf32>
    %178 = arith.addf %177, %173 : vector<2x8xf32>
    %179 = vector.broadcast %73 : vector<1x8xf32> to vector<2x8xf32>
    %180 = arith.addf %179, %172 : vector<2x8xf32>
    %cst_68 = arith.constant 1.000000e+00 : f32
    %181 = vector.broadcast %cst_68 : f32 to vector<2x8xf32>
    %182 = arith.divf %181, %180 : vector<2x8xf32>
    %183 = vector.broadcast %73 : vector<1x8xf32> to vector<2x8xf32>
    %184 = arith.mulf %183, %178 : vector<2x8xf32>
    %185 = arith.addf %184, %171 : vector<2x8xf32>
    %186 = arith.mulf %182, %185 : vector<2x8xf32>
    %187 = math.log %182 : vector<2x8xf32>
    %188 = vector.broadcast %76 : vector<1x8xf32> to vector<2x8xf32>
    %189 = arith.subf %188, %187 : vector<2x8xf32>
    %190 = arith.subf %186, %178 : vector<2x8xf32>
    %191 = arith.mulf %190, %190 : vector<2x8xf32>
    %192 = arith.addf %182, %191 : vector<2x8xf32>
    %193 = vector.broadcast %57 : vector<1x8xf32> to vector<2x8xf32>
    %194 = arith.divf %192, %193 : vector<2x8xf32>
    %195 = arith.addf %189, %194 : vector<2x8xf32>
    %cst_69 = arith.constant 1.000000e+00 : f32
    %196 = vector.broadcast %cst_69 : f32 to vector<2x8xf32>
    %197 = arith.subf %195, %196 : vector<2x8xf32>
    %cst_70 = arith.constant 5.000000e-01 : f32
    %198 = vector.broadcast %cst_70 : f32 to vector<2x8xf32>
    %199 = arith.mulf %198, %197 : vector<2x8xf32>
    %c6 = arith.constant 6 : index
    %c0_71 = arith.constant 0 : index
    %200 = vector.load %arg11[%c6, %c0_71] : memref<16x8xf32, #tpu.memory_space<vmem>>, vector<2x8xf32>
    tpu.vector_store %arg11[%c6, %c0_71], %186 {strides = array<i32>} : memref<16x8xf32, #tpu.memory_space<vmem>>, vector<2x8xf32>,
    %c6_72 = arith.constant 6 : index
    %c0_73 = arith.constant 0 : index
    %201 = vector.load %arg14[%c6_72, %c0_73] : memref<16x8xf32, #tpu.memory_space<vmem>>, vector<2x8xf32>
    tpu.vector_store %arg14[%c6_72, %c0_73], %182 {strides = array<i32>} : memref<16x8xf32, #tpu.memory_space<vmem>>, vector<2x8xf32>,
    %c6_74 = arith.constant 6 : index
    %c0_75 = arith.constant 0 : index
    %202 = vector.load %arg15[%c6_74, %c0_75] : memref<16x8xf32, #tpu.memory_space<vmem>>, vector<2x8xf32>
    tpu.vector_store %arg15[%c6_74, %c0_75], %199 {strides = array<i32>} : memref<16x8xf32, #tpu.memory_space<vmem>>, vector<2x8xf32>,
    %203 = vector.extract_strided_slice %31 {offsets = [8, 0], sizes = [2, 8], strides = [1, 1]} : vector<16x8xf32> to vector<2x8xf32>
    %204 = vector.extract_strided_slice %41 {offsets = [8, 0], sizes = [2, 8], strides = [1, 1]} : vector<16x8xf32> to vector<2x8xf32>
    %205 = vector.extract_strided_slice %43 {offsets = [8, 0], sizes = [2, 8], strides = [1, 1]} : vector<16x8xf32> to vector<2x8xf32>
    %cst_76 = arith.constant dense<0.000000e+00> : vector<2x8xf32>
    %206 = tpu.matmul %186, %8, %cst_76 {dimension_numbers = #tpu.dot_dimension_numbers<[1], [0], [0], [1], [0, 0, 1, 1], [], []>} : vector<2x8xf32>, vector<8x8xf32>, vector<2x8xf32> -> vector<2x8xf32>
    %207 = vector.broadcast %2 : vector<1x8xf32> to vector<2x8xf32>
    %208 = arith.addf %206, %207 : vector<2x8xf32>
    %209 = math.tanh %208 : vector<2x8xf32>
    %210 = arith.addf %209, %205 : vector<2x8xf32>
    %211 = vector.broadcast %73 : vector<1x8xf32> to vector<2x8xf32>
    %212 = arith.addf %211, %204 : vector<2x8xf32>
    %cst_77 = arith.constant 1.000000e+00 : f32
    %213 = vector.broadcast %cst_77 : f32 to vector<2x8xf32>
    %214 = arith.divf %213, %212 : vector<2x8xf32>
    %215 = vector.broadcast %73 : vector<1x8xf32> to vector<2x8xf32>
    %216 = arith.mulf %215, %210 : vector<2x8xf32>
    %217 = arith.addf %216, %203 : vector<2x8xf32>
    %218 = arith.mulf %214, %217 : vector<2x8xf32>
    %219 = math.log %214 : vector<2x8xf32>
    %220 = vector.broadcast %76 : vector<1x8xf32> to vector<2x8xf32>
    %221 = arith.subf %220, %219 : vector<2x8xf32>
    %222 = arith.subf %218, %210 : vector<2x8xf32>
    %223 = arith.mulf %222, %222 : vector<2x8xf32>
    %224 = arith.addf %214, %223 : vector<2x8xf32>
    %225 = vector.broadcast %57 : vector<1x8xf32> to vector<2x8xf32>
    %226 = arith.divf %224, %225 : vector<2x8xf32>
    %227 = arith.addf %221, %226 : vector<2x8xf32>
    %cst_78 = arith.constant 1.000000e+00 : f32
    %228 = vector.broadcast %cst_78 : f32 to vector<2x8xf32>
    %229 = arith.subf %227, %228 : vector<2x8xf32>
    %cst_79 = arith.constant 5.000000e-01 : f32
    %230 = vector.broadcast %cst_79 : f32 to vector<2x8xf32>
    %231 = arith.mulf %230, %229 : vector<2x8xf32>
    %c8_80 = arith.constant 8 : index
    %c0_81 = arith.constant 0 : index
    %232 = vector.load %arg11[%c8_80, %c0_81] : memref<16x8xf32, #tpu.memory_space<vmem>>, vector<2x8xf32>
    tpu.vector_store %arg11[%c8_80, %c0_81], %218 {strides = array<i32>} : memref<16x8xf32, #tpu.memory_space<vmem>>, vector<2x8xf32>,
    %c8_82 = arith.constant 8 : index
    %c0_83 = arith.constant 0 : index
    %233 = vector.load %arg14[%c8_82, %c0_83] : memref<16x8xf32, #tpu.memory_space<vmem>>, vector<2x8xf32>
    tpu.vector_store %arg14[%c8_82, %c0_83], %214 {strides = array<i32>} : memref<16x8xf32, #tpu.memory_space<vmem>>, vector<2x8xf32>,
    %c8_84 = arith.constant 8 : index
    %c0_85 = arith.constant 0 : index
    %234 = vector.load %arg15[%c8_84, %c0_85] : memref<16x8xf32, #tpu.memory_space<vmem>>, vector<2x8xf32>
    tpu.vector_store %arg15[%c8_84, %c0_85], %231 {strides = array<i32>} : memref<16x8xf32, #tpu.memory_space<vmem>>, vector<2x8xf32>,
    %235 = vector.extract_strided_slice %31 {offsets = [10, 0], sizes = [2, 8], strides = [1, 1]} : vector<16x8xf32> to vector<2x8xf32>
    %236 = vector.extract_strided_slice %41 {offsets = [10, 0], sizes = [2, 8], strides = [1, 1]} : vector<16x8xf32> to vector<2x8xf32>
    %237 = vector.extract_strided_slice %43 {offsets = [10, 0], sizes = [2, 8], strides = [1, 1]} : vector<16x8xf32> to vector<2x8xf32>
    %cst_86 = arith.constant dense<0.000000e+00> : vector<2x8xf32>
    %238 = tpu.matmul %218, %8, %cst_86 {dimension_numbers = #tpu.dot_dimension_numbers<[1], [0], [0], [1], [0, 0, 1, 1], [], []>} : vector<2x8xf32>, vector<8x8xf32>, vector<2x8xf32> -> vector<2x8xf32>
    %239 = vector.broadcast %2 : vector<1x8xf32> to vector<2x8xf32>
    %240 = arith.addf %238, %239 : vector<2x8xf32>
    %241 = math.tanh %240 : vector<2x8xf32>
    %242 = arith.addf %241, %237 : vector<2x8xf32>
    %243 = vector.broadcast %73 : vector<1x8xf32> to vector<2x8xf32>
    %244 = arith.addf %243, %236 : vector<2x8xf32>
    %cst_87 = arith.constant 1.000000e+00 : f32
    %245 = vector.broadcast %cst_87 : f32 to vector<2x8xf32>
    %246 = arith.divf %245, %244 : vector<2x8xf32>
    %247 = vector.broadcast %73 : vector<1x8xf32> to vector<2x8xf32>
    %248 = arith.mulf %247, %242 : vector<2x8xf32>
    %249 = arith.addf %248, %235 : vector<2x8xf32>
    %250 = arith.mulf %246, %249 : vector<2x8xf32>
    %251 = math.log %246 : vector<2x8xf32>
    %252 = vector.broadcast %76 : vector<1x8xf32> to vector<2x8xf32>
    %253 = arith.subf %252, %251 : vector<2x8xf32>
    %254 = arith.subf %250, %242 : vector<2x8xf32>
    %255 = arith.mulf %254, %254 : vector<2x8xf32>
    %256 = arith.addf %246, %255 : vector<2x8xf32>
    %257 = vector.broadcast %57 : vector<1x8xf32> to vector<2x8xf32>
    %258 = arith.divf %256, %257 : vector<2x8xf32>
    %259 = arith.addf %253, %258 : vector<2x8xf32>
    %cst_88 = arith.constant 1.000000e+00 : f32
    %260 = vector.broadcast %cst_88 : f32 to vector<2x8xf32>
    %261 = arith.subf %259, %260 : vector<2x8xf32>
    %cst_89 = arith.constant 5.000000e-01 : f32
    %262 = vector.broadcast %cst_89 : f32 to vector<2x8xf32>
    %263 = arith.mulf %262, %261 : vector<2x8xf32>
    %c10 = arith.constant 10 : index
    %c0_90 = arith.constant 0 : index
    %264 = vector.load %arg11[%c10, %c0_90] : memref<16x8xf32, #tpu.memory_space<vmem>>, vector<2x8xf32>
    tpu.vector_store %arg11[%c10, %c0_90], %250 {strides = array<i32>} : memref<16x8xf32, #tpu.memory_space<vmem>>, vector<2x8xf32>,
    %c10_91 = arith.constant 10 : index
    %c0_92 = arith.constant 0 : index
    %265 = vector.load %arg14[%c10_91, %c0_92] : memref<16x8xf32, #tpu.memory_space<vmem>>, vector<2x8xf32>
    tpu.vector_store %arg14[%c10_91, %c0_92], %246 {strides = array<i32>} : memref<16x8xf32, #tpu.memory_space<vmem>>, vector<2x8xf32>,
    %c10_93 = arith.constant 10 : index
    %c0_94 = arith.constant 0 : index
    %266 = vector.load %arg15[%c10_93, %c0_94] : memref<16x8xf32, #tpu.memory_space<vmem>>, vector<2x8xf32>
    tpu.vector_store %arg15[%c10_93, %c0_94], %263 {strides = array<i32>} : memref<16x8xf32, #tpu.memory_space<vmem>>, vector<2x8xf32>,
    %267 = vector.extract_strided_slice %31 {offsets = [12, 0], sizes = [2, 8], strides = [1, 1]} : vector<16x8xf32> to vector<2x8xf32>
    %268 = vector.extract_strided_slice %41 {offsets = [12, 0], sizes = [2, 8], strides = [1, 1]} : vector<16x8xf32> to vector<2x8xf32>
    %269 = vector.extract_strided_slice %43 {offsets = [12, 0], sizes = [2, 8], strides = [1, 1]} : vector<16x8xf32> to vector<2x8xf32>
    %cst_95 = arith.constant dense<0.000000e+00> : vector<2x8xf32>
    %270 = tpu.matmul %250, %8, %cst_95 {dimension_numbers = #tpu.dot_dimension_numbers<[1], [0], [0], [1], [0, 0, 1, 1], [], []>} : vector<2x8xf32>, vector<8x8xf32>, vector<2x8xf32> -> vector<2x8xf32>
    %271 = vector.broadcast %2 : vector<1x8xf32> to vector<2x8xf32>
    %272 = arith.addf %270, %271 : vector<2x8xf32>
    %273 = math.tanh %272 : vector<2x8xf32>
    %274 = arith.addf %273, %269 : vector<2x8xf32>
    %275 = vector.broadcast %73 : vector<1x8xf32> to vector<2x8xf32>
    %276 = arith.addf %275, %268 : vector<2x8xf32>
    %cst_96 = arith.constant 1.000000e+00 : f32
    %277 = vector.broadcast %cst_96 : f32 to vector<2x8xf32>
    %278 = arith.divf %277, %276 : vector<2x8xf32>
    %279 = vector.broadcast %73 : vector<1x8xf32> to vector<2x8xf32>
    %280 = arith.mulf %279, %274 : vector<2x8xf32>
    %281 = arith.addf %280, %267 : vector<2x8xf32>
    %282 = arith.mulf %278, %281 : vector<2x8xf32>
    %283 = math.log %278 : vector<2x8xf32>
    %284 = vector.broadcast %76 : vector<1x8xf32> to vector<2x8xf32>
    %285 = arith.subf %284, %283 : vector<2x8xf32>
    %286 = arith.subf %282, %274 : vector<2x8xf32>
    %287 = arith.mulf %286, %286 : vector<2x8xf32>
    %288 = arith.addf %278, %287 : vector<2x8xf32>
    %289 = vector.broadcast %57 : vector<1x8xf32> to vector<2x8xf32>
    %290 = arith.divf %288, %289 : vector<2x8xf32>
    %291 = arith.addf %285, %290 : vector<2x8xf32>
    %cst_97 = arith.constant 1.000000e+00 : f32
    %292 = vector.broadcast %cst_97 : f32 to vector<2x8xf32>
    %293 = arith.subf %291, %292 : vector<2x8xf32>
    %cst_98 = arith.constant 5.000000e-01 : f32
    %294 = vector.broadcast %cst_98 : f32 to vector<2x8xf32>
    %295 = arith.mulf %294, %293 : vector<2x8xf32>
    %c12 = arith.constant 12 : index
    %c0_99 = arith.constant 0 : index
    %296 = vector.load %arg11[%c12, %c0_99] : memref<16x8xf32, #tpu.memory_space<vmem>>, vector<2x8xf32>
    tpu.vector_store %arg11[%c12, %c0_99], %282 {strides = array<i32>} : memref<16x8xf32, #tpu.memory_space<vmem>>, vector<2x8xf32>,
    %c12_100 = arith.constant 12 : index
    %c0_101 = arith.constant 0 : index
    %297 = vector.load %arg14[%c12_100, %c0_101] : memref<16x8xf32, #tpu.memory_space<vmem>>, vector<2x8xf32>
    tpu.vector_store %arg14[%c12_100, %c0_101], %278 {strides = array<i32>} : memref<16x8xf32, #tpu.memory_space<vmem>>, vector<2x8xf32>,
    %c12_102 = arith.constant 12 : index
    %c0_103 = arith.constant 0 : index
    %298 = vector.load %arg15[%c12_102, %c0_103] : memref<16x8xf32, #tpu.memory_space<vmem>>, vector<2x8xf32>
    tpu.vector_store %arg15[%c12_102, %c0_103], %295 {strides = array<i32>} : memref<16x8xf32, #tpu.memory_space<vmem>>, vector<2x8xf32>,
    %299 = vector.extract_strided_slice %31 {offsets = [14, 0], sizes = [2, 8], strides = [1, 1]} : vector<16x8xf32> to vector<2x8xf32>
    %300 = vector.extract_strided_slice %41 {offsets = [14, 0], sizes = [2, 8], strides = [1, 1]} : vector<16x8xf32> to vector<2x8xf32>
    %301 = vector.extract_strided_slice %43 {offsets = [14, 0], sizes = [2, 8], strides = [1, 1]} : vector<16x8xf32> to vector<2x8xf32>
    %cst_104 = arith.constant dense<0.000000e+00> : vector<2x8xf32>
    %302 = tpu.matmul %282, %8, %cst_104 {dimension_numbers = #tpu.dot_dimension_numbers<[1], [0], [0], [1], [0, 0, 1, 1], [], []>} : vector<2x8xf32>, vector<8x8xf32>, vector<2x8xf32> -> vector<2x8xf32>
    %303 = vector.broadcast %2 : vector<1x8xf32> to vector<2x8xf32>
    %304 = arith.addf %302, %303 : vector<2x8xf32>
    %305 = math.tanh %304 : vector<2x8xf32>
    %306 = arith.addf %305, %301 : vector<2x8xf32>
    %307 = vector.broadcast %73 : vector<1x8xf32> to vector<2x8xf32>
    %308 = arith.addf %307, %300 : vector<2x8xf32>
    %cst_105 = arith.constant 1.000000e+00 : f32
    %309 = vector.broadcast %cst_105 : f32 to vector<2x8xf32>
    %310 = arith.divf %309, %308 : vector<2x8xf32>
    %311 = vector.broadcast %73 : vector<1x8xf32> to vector<2x8xf32>
    %312 = arith.mulf %311, %306 : vector<2x8xf32>
    %313 = arith.addf %312, %299 : vector<2x8xf32>
    %314 = arith.mulf %310, %313 : vector<2x8xf32>
    %315 = math.log %310 : vector<2x8xf32>
    %316 = vector.broadcast %76 : vector<1x8xf32> to vector<2x8xf32>
    %317 = arith.subf %316, %315 : vector<2x8xf32>
    %318 = arith.subf %314, %306 : vector<2x8xf32>
    %319 = arith.mulf %318, %318 : vector<2x8xf32>
    %320 = arith.addf %310, %319 : vector<2x8xf32>
    %321 = vector.broadcast %57 : vector<1x8xf32> to vector<2x8xf32>
    %322 = arith.divf %320, %321 : vector<2x8xf32>
    %323 = arith.addf %317, %322 : vector<2x8xf32>
    %cst_106 = arith.constant 1.000000e+00 : f32
    %324 = vector.broadcast %cst_106 : f32 to vector<2x8xf32>
    %325 = arith.subf %323, %324 : vector<2x8xf32>
    %cst_107 = arith.constant 5.000000e-01 : f32
    %326 = vector.broadcast %cst_107 : f32 to vector<2x8xf32>
    %327 = arith.mulf %326, %325 : vector<2x8xf32>
    %c14_108 = arith.constant 14 : index
    %c0_109 = arith.constant 0 : index
    %328 = vector.load %arg11[%c14_108, %c0_109] : memref<16x8xf32, #tpu.memory_space<vmem>>, vector<2x8xf32>
    tpu.vector_store %arg11[%c14_108, %c0_109], %314 {strides = array<i32>} : memref<16x8xf32, #tpu.memory_space<vmem>>, vector<2x8xf32>,
    %c14_110 = arith.constant 14 : index
    %c0_111 = arith.constant 0 : index
    %329 = vector.load %arg14[%c14_110, %c0_111] : memref<16x8xf32, #tpu.memory_space<vmem>>, vector<2x8xf32>
    tpu.vector_store %arg14[%c14_110, %c0_111], %310 {strides = array<i32>} : memref<16x8xf32, #tpu.memory_space<vmem>>, vector<2x8xf32>,
    %c14_112 = arith.constant 14 : index
    %c0_113 = arith.constant 0 : index
    %330 = vector.load %arg15[%c14_112, %c0_113] : memref<16x8xf32, #tpu.memory_space<vmem>>, vector<2x8xf32>
    tpu.vector_store %arg15[%c14_112, %c0_113], %327 {strides = array<i32>} : memref<16x8xf32, #tpu.memory_space<vmem>>, vector<2x8xf32>,
    %c0_114 = arith.constant 0 : index
    %c0_115 = arith.constant 0 : index
    %331 = vector.load %arg11[%c0_114, %c0_115] : memref<16x8xf32, #tpu.memory_space<vmem>>, vector<16x8xf32>
    %c0_116 = arith.constant 0 : index
    %c0_117 = arith.constant 0 : index
    %332 = vector.load %arg14[%c0_116, %c0_117] : memref<16x8xf32, #tpu.memory_space<vmem>>, vector<16x8xf32>
    %333 = math.sqrt %332 : vector<16x8xf32>
    %334 = vector.shape_cast %331 : vector<16x8xf32> to vector<1x16x8xf32>
    %335 = vector.shape_cast %333 : vector<16x8xf32> to vector<1x16x8xf32>
    %c0_118 = arith.constant 0 : index
    %c0_119 = arith.constant 0 : index
    %c0_120 = arith.constant 0 : index
    %336 = vector.load %arg4[%c0_118, %c0_119, %c0_120] : memref<4x16x8xf32, #tpu.memory_space<vmem>>, vector<4x16x8xf32>
    %337 = vector.broadcast %335 : vector<1x16x8xf32> to vector<4x16x8xf32>
    %338 = arith.mulf %337, %336 : vector<4x16x8xf32>
    %339 = vector.broadcast %334 : vector<1x16x8xf32> to vector<4x16x8xf32>
    %340 = arith.addf %339, %338 : vector<4x16x8xf32>
    %c0_121 = arith.constant 0 : index
    %c0_122 = arith.constant 0 : index
    %c0_123 = arith.constant 0 : index
    %341 = vector.load %arg10[%c0_121, %c0_122, %c0_123] : memref<4x16x8xf32, #tpu.memory_space<vmem>>, vector<4x16x8xf32>
    tpu.vector_store %arg10[%c0_121, %c0_122, %c0_123], %340 {strides = array<i32>} : memref<4x16x8xf32, #tpu.memory_space<vmem>>, vector<4x16x8xf32>,
    %342 = vector.shape_cast %340 : vector<4x16x8xf32> to vector<64x8xf32>
    %cst_124 = arith.constant dense<0.000000e+00> : vector<64x32xf32>
    %343 = tpu.matmul %342, %9, %cst_124 {dimension_numbers = #tpu.dot_dimension_numbers<[1], [0], [0], [1], [0, 0, 1, 1], [], []>} : vector<64x8xf32>, vector<8x32xf32>, vector<64x32xf32> -> vector<64x32xf32>
    %344 = vector.broadcast %6 : vector<1x32xf32> to vector<64x32xf32>
    %345 = arith.addf %343, %344 : vector<64x32xf32>
    %346 = math.exp %345 : vector<64x32xf32>
    %347 = vector.shape_cast %345 : vector<64x32xf32> to vector<4x16x32xf32>
    %cst_125 = arith.constant dense<0.000000e+00> : vector<16x32xf32>
    %348 = vector.multi_reduction <add>, %347, %cst_125 [0] : vector<4x16x32xf32> to vector<16x32xf32>
    %cst_126 = arith.constant 4.000000e+00 : f32
    %349 = vector.broadcast %cst_126 : f32 to vector<16x32xf32>
    %350 = arith.divf %348, %349 : vector<16x32xf32>
    %351 = vector.shape_cast %346 : vector<64x32xf32> to vector<4x16x32xf32>
    %cst_127 = arith.constant dense<0.000000e+00> : vector<16x32xf32>
    %352 = vector.multi_reduction <add>, %351, %cst_127 [0] : vector<4x16x32xf32> to vector<16x32xf32>
    %cst_128 = arith.constant 4.000000e+00 : f32
    %353 = vector.broadcast %cst_128 : f32 to vector<16x32xf32>
    %354 = arith.divf %352, %353 : vector<16x32xf32>
    %c0_129 = arith.constant 0 : index
    %c0_130 = arith.constant 0 : index
    %355 = vector.load %arg2[%c0_129, %c0_130] : memref<16x32xf32, #tpu.memory_space<vmem>>, vector<16x32xf32>
    %356 = arith.mulf %355, %350 : vector<16x32xf32>
    %357 = arith.subf %356, %354 : vector<16x32xf32>
    %c0_131 = arith.constant 0 : index
    %c0_132 = arith.constant 0 : index
    %358 = vector.load %arg15[%c0_131, %c0_132] : memref<16x8xf32, #tpu.memory_space<vmem>>, vector<16x8xf32>
    %cst_133 = arith.constant dense<0.000000e+00> : vector<16xf32>
    %359 = vector.multi_reduction <add>, %358, %cst_133 [1] : vector<16x8xf32> to vector<16xf32>
    %360 = vector.shape_cast %359 : vector<16xf32> to vector<16x1xf32>
    %c0_134 = arith.constant 0 : index
    %c0_135 = arith.constant 0 : index
    %361 = vector.load %arg12[%c0_134, %c0_135] : memref<16x2xf32, #tpu.memory_space<vmem>>, vector<16x1xf32>
    tpu.vector_store %arg12[%c0_134, %c0_135], %360 {strides = array<i32>} : memref<16x2xf32, #tpu.memory_space<vmem>>, vector<16x1xf32>,
    %cst_136 = arith.constant dense<0.000000e+00> : vector<16xf32>
    %362 = vector.multi_reduction <add>, %357, %cst_136 [1] : vector<16x32xf32> to vector<16xf32>
    %363 = vector.shape_cast %362 : vector<16xf32> to vector<16x1xf32>
    %c0_137 = arith.constant 0 : index
    %c1_138 = arith.constant 1 : index
    %364 = vector.load %arg12[%c0_137, %c1_138] : memref<16x2xf32, #tpu.memory_space<vmem>>, vector<16x1xf32>
    tpu.vector_store %arg12[%c0_137, %c1_138], %363 {strides = array<i32>} : memref<16x2xf32, #tpu.memory_space<vmem>>, vector<16x1xf32>,
    return
  }
}

</mosaic_0001>

<llo_original>
// kernel: squeeze.26
$region0: #{squeeze.26}
  %s0 = inlined_call_operand.vmem [shape: f32[16], index: 0, kind: input, shape index: {}]
  %s1 = inlined_call_operand.vmem [shape: f32[8,2], index: 1, kind: output, shape index: {}]
  $region1: #{squeeze.26} parent=0
    #allocation0 [shape = 'u8[4096]{0}', space=vmem, size = 0x1000, scoped, tag = 'scoped mem for input reshape']
    %s3 = sshll.u32 1, 1
    %s4 = ssub.s32 %s3, 1
    %v5 = vld [vmem:[%s0] sm:%s4]
    %6 = vst [vmem:[#allocation0] sm:%s4] %v5
    %v7 = vld [vmem:[#allocation0] sm:$0x1]
    %vm8 = vcmask 15360
    %9 = vst.msk [vmem:[%s1] sm:$0x1] %vm8, %v7
    %v10 = vld [vmem:[#allocation0] sm:$0x1]
    %11 = vrot.lane.b32.xlu0 %v10, 126
    %v12 = vpop.permute.xlu0 %11
    %vm13 = vcmask 15360
    %s14 = scalar_lea.vmem %s1, 1
    %15 = vst.msk [vmem:[%s14] sm:$0x1] %vm13, %v12
    %v16 = vld [vmem:[#allocation0] sm:$0x1]
    %17 = vrot.lane.b32.xlu0 %v16, 124
    %v18 = vpop.permute.xlu0 %17
    %vm19 = vcmask 15360
    %s20 = scalar_lea.vmem %s1, 2
    %21 = vst.msk [vmem:[%s20] sm:$0x1] %vm19, %v18
    %v22 = vld [vmem:[#allocation0] sm:$0x1]
    %23 = vrot.lane.b32.xlu0 %v22, 122
    %v24 = vpop.permute.xlu0 %23
    %vm25 = vcmask 15360
    %s26 = scalar_lea.vmem %s1, 3
    %27 = vst.msk [vmem:[%s26] sm:$0x1] %vm25, %v24
    %v28 = vld [vmem:[#allocation0] sm:$0x1]
    %29 = vrot.lane.b32.xlu0 %v28, 120
    %v30 = vpop.permute.xlu0 %29
    %vm31 = vcmask 15360
    %s32 = scalar_lea.vmem %s1, 4
    %33 = vst.msk [vmem:[%s32] sm:$0x1] %vm31, %v30
    %v34 = vld [vmem:[#allocation0] sm:$0x1]
    %35 = vrot.lane.b32.xlu0 %v34, 118
    %v36 = vpop.permute.xlu0 %35
    %vm37 = vcmask 15360
    %s38 = scalar_lea.vmem %s1, 5
    %39 = vst.msk [vmem:[%s38] sm:$0x1] %vm37, %v36
    %v40 = vld [vmem:[#allocation0] sm:$0x1]
    %41 = vrot.lane.b32.xlu0 %v40, 116
    %v42 = vpop.permute.xlu0 %41
    %vm43 = vcmask 15360
    %s44 = scalar_lea.vmem %s1, 6
    %45 = vst.msk [vmem:[%s44] sm:$0x1] %vm43, %v42
    %v46 = vld [vmem:[#allocation0] sm:$0x1]
    %47 = vrot.lane.b32.xlu0 %v46, 114
    %v48 = vpop.permute.xlu0 %47
    %vm49 = vcmask 15360
    %s50 = scalar_lea.vmem %s1, 7
    %51 = vst.msk [vmem:[%s50] sm:$0x1] %vm49, %v48

// kernel: forward.3
$region0: #{forward.3}
  #allocation0 [shape = 'u32[]', space=smem, size = 0x4, offset = 0x4, fixed_abs, tag = 'smem constant byte address 0x4 - core index']
  #allocation1 [shape = 'u32[144,128]{1,0:T(1,128)}', space=vmem, size = 0x12000, scoped, tag = 'internal scratch']
  #allocation2 [shape = 'f32[16,40]{1,0:T(8,128)}', space=vmem, size = 0x2000, scoped, tag = 'scratch operand']
  #allocation3 [shape = 'f32[16,8]{1,0:T(8,128)}', space=vmem, size = 0x2000, scoped, tag = 'scratch operand']
  #allocation4 [shape = 'f32[16,8]{1,0:T(8,128)}', space=vmem, size = 0x2000, scoped, tag = 'scratch operand']
  %s0 = inlined_call_operand.vmem [shape: f32[16,32], index: 0, kind: input, shape index: {}]
  %s1 = inlined_call_operand.vmem [shape: f32[16,4], index: 1, kind: input, shape index: {}]
  %s2 = inlined_call_operand.vmem [shape: f32[16,32], index: 2, kind: input, shape index: {}]
  %s3 = inlined_call_operand.vmem [shape: f32[16,2], index: 3, kind: input, shape index: {}]
  %s4 = inlined_call_operand.vmem [shape: f32[4,16,8], index: 4, kind: input, shape index: {}]
  %s5 = inlined_call_operand.vmem [shape: f32[32,40], index: 5, kind: input, shape index: {}]
  %s6 = inlined_call_operand.vmem [shape: f32[40,40], index: 6, kind: input, shape index: {}]
  %s7 = inlined_call_operand.vmem [shape: f32[8,8], index: 7, kind: input, shape index: {}]
  %s8 = inlined_call_operand.vmem [shape: f32[8,32], index: 8, kind: input, shape index: {}]
  %s9 = inlined_call_operand.vmem [shape: f32[8,40], index: 9, kind: input, shape index: {}]
  %s10 = inlined_call_operand.vmem [shape: f32[4,16,8], index: 10, kind: output, shape index: {0}]
  %s11 = inlined_call_operand.vmem [shape: f32[16,8], index: 11, kind: output, shape index: {1}]
  %s12 = inlined_call_operand.vmem [shape: f32[16,2], index: 12, kind: output, shape index: {2}]
  %13 = xla_tuple %s10, %s11, %s12
  %s14 = sld [smem:[#allocation0]]
  $region66: #{forward.3} parent=0
    _
  %s16 = ssub.s32 1, %s14
  %s17 = scalar_select 0, %s16, %s14
  // Predicated region
  $region2: #{forward.3} parent=0 // pred_check
    _
  $region3: #{forward.3} parent=0 // pred_check_branch
    %19 = sbr.rel (0) target = $region5
  $region4: #{forward.3} parent=0 // pred_region
    _
  $region5: #{forward.3} parent=0 // pred_fallthru
    _
  // Predicated region
  $region6: #{forward.3} parent=0 // pred_check
    _
  $region7: #{forward.3} parent=0 // pred_check_branch
    %21 = sbr.rel (0) target = $region9
  $region8: #{forward.3} parent=0 // pred_region
    _
  $region9: #{forward.3} parent=0 // pred_fallthru
    _
  // Predicated region
  $region10: #{forward.3} parent=0 // pred_check
    _
  $region11: #{forward.3} parent=0 // pred_check_branch
    %23 = sbr.rel (0) target = $region13
  $region12: #{forward.3} parent=0 // pred_region
    _
  $region13: #{forward.3} parent=0 // pred_fallthru
    _
  // Predicated region
  $region14: #{forward.3} parent=0 // pred_check
    _
  $region15: #{forward.3} parent=0 // pred_check_branch
    %25 = sbr.rel (0) target = $region17
  $region16: #{forward.3} parent=0 // pred_region
    _
  $region17: #{forward.3} parent=0 // pred_fallthru
    _
  // Predicated region
  $region18: #{forward.3} parent=0 // pred_check
    _
  $region19: #{forward.3} parent=0 // pred_check_branch
    %27 = sbr.rel (0) target = $region21
  $region20: #{forward.3} parent=0 // pred_region
    _
  $region21: #{forward.3} parent=0 // pred_fallthru
    _
  // Predicated region
  $region22: #{forward.3} parent=0 // pred_check
    _
  $region23: #{forward.3} parent=0 // pred_check_branch
    %29 = sbr.rel (0) target = $region25
  $region24: #{forward.3} parent=0 // pred_region
    _
  $region25: #{forward.3} parent=0 // pred_fallthru
    _
  // Predicated region
  $region26: #{forward.3} parent=0 // pred_check
    _
  $region27: #{forward.3} parent=0 // pred_check_branch
    %31 = sbr.rel (0) target = $region29
  $region28: #{forward.3} parent=0 // pred_region
    _
  $region29: #{forward.3} parent=0 // pred_fallthru
    _
  // Predicated region
  $region30: #{forward.3} parent=0 // pred_check
    _
  $region31: #{forward.3} parent=0 // pred_check_branch
    %33 = sbr.rel (0) target = $region33
  $region32: #{forward.3} parent=0 // pred_region
    _
  $region33: #{forward.3} parent=0 // pred_fallthru
    _
  // Predicated region
  $region34: #{forward.3} parent=0 // pred_check
    _
  $region35: #{forward.3} parent=0 // pred_check_branch
    %35 = sbr.rel (0) target = $region37
  $region36: #{forward.3} parent=0 // pred_region
    _
  $region37: #{forward.3} parent=0 // pred_fallthru
    _
  // Predicated region
  $region38: #{forward.3} parent=0 // pred_check
    _
  $region39: #{forward.3} parent=0 // pred_check_branch
    %37 = sbr.rel (0) target = $region41
  $region40: #{forward.3} parent=0 // pred_region
    _
  $region41: #{forward.3} parent=0 // pred_fallthru
    _
  %v38 = vld [vmem:[%s9] sm:$0x1]
  %v39 = vld [vmem:[%s9 + $0x1] sm:$0x1]
  %v40 = vld [vmem:[%s9 + $0x2] sm:$0x1]
  %v41 = vld [vmem:[%s9 + $0x3] sm:$0x1]
  %v42 = vld [vmem:[%s9 + $0x4] sm:$0xf]
  %v43 = vld [vmem:[%s7] sm:$0xff]
  %v44 = vld [vmem:[%s8] sm:$0xff]
  %v45 = vld [vmem:[%s3] sm:$0xff]
  %v46 = vld [vmem:[%s3 + $0x8] sm:$0xff]
  %v47 = vld [vmem:[%s0] sm:$0xff]
  %v48 = vld [vmem:[%s0 + $0x8] sm:$0xff]
  %v49 = vld [vmem:[%s5] sm:$0xff]
  %v50 = vld [vmem:[%s5 + $0x8] sm:$0xff]
  %v51 = vld [vmem:[%s5 + $0x10] sm:$0xff]
  %v52 = vld [vmem:[%s5 + $0x18] sm:$0xff]
  %v53 = vlaneseq
  %v54 = vshrl.u32 %v53, 7
  %v55 = vsub.s32 0, %v54
  %v56 = vrot.slane %v38, %v55
  %vm57 = vcmask 261120
  %v59 = vsel %vm57, %v47, 0
  %v62 = vsel %vm57, %v48, 0
  %64 = vmatprep.subr.mxu0 0.0
  %65 = vmatpush1.msra.mxu0 0.0
  %66 = vmatprep.subr.mxu0 0.0
  %67 = vmatpush1.msra.mxu0 0.0
  %68 = vmatprep.subr.mxu0 0.0
  %69 = vmatpush1.msra.mxu0 0.0
  %70 = vmatprep.subr.mxu0 0.0
  %71 = vmatpush1.msra.mxu0 0.0
  %72 = vmatprep.subr.mxu0 0.0
  %73 = vmatpush1.msra.mxu0 0.0
  %74 = vmatprep.subr.mxu0 0.0
  %75 = vmatpush1.msra.mxu0 0.0
  %76 = vmatprep.subr.mxu0 0.0
  %77 = vmatpush1.msra.mxu0 0.0
  %78 = vmatprep.subr.mxu0 0.0
  %79 = vmatpush1.msra.mxu0 0.0
  %80 = vmatprep.subr.mxu0 0.0
  %81 = vmatpush1.msra.mxu0 0.0
  %82 = vmatprep.subr.mxu0 0.0
  %83 = vmatpush1.msra.mxu0 0.0
  %84 = vmatprep.subr.mxu0 0.0
  %85 = vmatpush1.msra.mxu0 0.0
  %86 = vmatprep.subr.mxu0 0.0
  %87 = vmatpush1.msra.mxu0 0.0
  %88 = vmatprep.subr.mxu0 0.0
  %89 = vmatpush1.msra.mxu0 %v52
  %90 = vmatprep.subr.mxu0 0.0
  %91 = vmatpush1.msra.mxu0 %v51
  %92 = vmatprep.subr.mxu0 0.0
  %93 = vmatpush1.msra.mxu0 %v50
  %94 = vmatprep.subr.mxu0 0.0
  %95 = vmatpush1.msra.mxu0 %v49
  %96 = vmatprep.subr.mxu0 0.0
  %97 = vmatpush2.msra.mxu0 0.0
  %98 = vmatprep.subr.mxu0 0.0
  %99 = vmatpush2.msra.mxu0 0.0
  %100 = vmatprep.subr.mxu0 0.0
  %101 = vmatpush2.msra.mxu0 0.0
  %102 = vmatprep.subr.mxu0 0.0
  %103 = vmatpush2.msra.mxu0 0.0
  %104 = vmatprep.subr.mxu0 0.0
  %105 = vmatpush2.msra.mxu0 0.0
  %106 = vmatprep.subr.mxu0 0.0
  %107 = vmatpush2.msra.mxu0 0.0
  %108 = vmatprep.subr.mxu0 0.0
  %109 = vmatpush2.msra.mxu0 0.0
  %110 = vmatprep.subr.mxu0 0.0
  %111 = vmatpush2.msra.mxu0 0.0
  %112 = vmatprep.subr.mxu0 0.0
  %113 = vmatpush2.msra.mxu0 0.0
  %114 = vmatprep.subr.mxu0 0.0
  %115 = vmatpush2.msra.mxu0 0.0
  %116 = vmatprep.subr.mxu0 0.0
  %117 = vmatpush2.msra.mxu0 0.0
  %118 = vmatprep.subr.mxu0 0.0
  %119 = vmatpush2.msra.mxu0 0.0
  %120 = vmatprep.subr.mxu0 0.0
  %121 = vmatpush2.msra.mxu0 0.0
  %122 = vmatprep.subr.mxu0 0.0
  %123 = vmatpush2.msra.mxu0 0.0
  %124 = vmatprep.subr.mxu0 0.0
  %125 = vmatpush2.msra.mxu0 0.0
  %126 = vmatprep.subr.mxu0 0.0
  %127 = vmatpush2.msra.mxu0 0.0
  %128 = vmatprep.mubr.f32.mxu0 0.0
  %129 = vmatmul.mubr.f32.gmra.mxu0 %v59
  %v130 = vpop.f32.mrf.mxu0
  %v131 = vadd.f32 %v56, %v130
  %v132 = vpop.f32.mrf.mxu0
  %133 = vmatprep.mubr.f32.mxu0 0.0
  %134 = vmatmul.mubr.f32.gmra.mxu0 %v62
  %v135 = vpop.f32.mrf.mxu0
  %v136 = vadd.f32 %v56, %v135
  %v137 = vpop.f32.mrf.mxu0
  %138 = vdwg.mxu0
  %140 = vset.pattern.permute.xlu0 0
  %141 = vperm.xlu0 %140, %v45
  %v142 = vpop.permute.xlu0 %141
  %145 = vset.pattern.permute.xlu0 0
  %146 = vperm.xlu0 %145, %v46
  %v147 = vpop.permute.xlu0 %146
  %v149 = vmul.f32 %v142, %v131
  %v150 = vmul.f32 %v147, %v136
  %v151 = vld [vmem:[%s6] sm:$0xff]
  %v152 = vld [vmem:[%s6 + $0x8] sm:$0xff]
  %v153 = vld [vmem:[%s6 + $0x10] sm:$0xff]
  %v154 = vld [vmem:[%s6 + $0x18] sm:$0xff]
  %v155 = vld [vmem:[%s6 + $0x20] sm:$0xff]
  %v156 = vlaneseq
  %v157 = vshrl.u32 %v156, 7
  %v158 = vsub.s32 0, %v157
  %v159 = vrot.slane %v39, %v158
  %vm160 = vcmask 326656
  %v162 = vsel %vm160, %v149, 0
  %v165 = vsel %vm160, %v150, 0
  %167 = vmatprep.subr.mxu0 0.0
  %168 = vmatpush1.msra.mxu0 0.0
  %169 = vmatprep.subr.mxu0 0.0
  %170 = vmatpush1.msra.mxu0 0.0
  %171 = vmatprep.subr.mxu0 0.0
  %172 = vmatpush1.msra.mxu0 0.0
  %173 = vmatprep.subr.mxu0 0.0
  %174 = vmatpush1.msra.mxu0 0.0
  %175 = vmatprep.subr.mxu0 0.0
  %176 = vmatpush1.msra.mxu0 0.0
  %177 = vmatprep.subr.mxu0 0.0
  %178 = vmatpush1.msra.mxu0 0.0
  %179 = vmatprep.subr.mxu0 0.0
  %180 = vmatpush1.msra.mxu0 0.0
  %181 = vmatprep.subr.mxu0 0.0
  %182 = vmatpush1.msra.mxu0 0.0
  %183 = vmatprep.subr.mxu0 0.0
  %184 = vmatpush1.msra.mxu0 0.0
  %185 = vmatprep.subr.mxu0 0.0
  %186 = vmatpush1.msra.mxu0 0.0
  %187 = vmatprep.subr.mxu0 0.0
  %188 = vmatpush1.msra.mxu0 0.0
  %189 = vmatprep.subr.mxu0 0.0
  %190 = vmatpush1.msra.mxu0 %v155
  %191 = vmatprep.subr.mxu0 0.0
  %192 = vmatpush1.msra.mxu0 %v154
  %193 = vmatprep.subr.mxu0 0.0
  %194 = vmatpush1.msra.mxu0 %v153
  %195 = vmatprep.subr.mxu0 0.0
  %196 = vmatpush1.msra.mxu0 %v152
  %197 = vmatprep.subr.mxu0 0.0
  %198 = vmatpush1.msra.mxu0 %v151
  %199 = vmatprep.subr.mxu0 0.0
  %200 = vmatpush2.msra.mxu0 0.0
  %201 = vmatprep.subr.mxu0 0.0
  %202 = vmatpush2.msra.mxu0 0.0
  %203 = vmatprep.subr.mxu0 0.0
  %204 = vmatpush2.msra.mxu0 0.0
  %205 = vmatprep.subr.mxu0 0.0
  %206 = vmatpush2.msra.mxu0 0.0
  %207 = vmatprep.subr.mxu0 0.0
  %208 = vmatpush2.msra.mxu0 0.0
  %209 = vmatprep.subr.mxu0 0.0
  %210 = vmatpush2.msra.mxu0 0.0
  %211 = vmatprep.subr.mxu0 0.0
  %212 = vmatpush2.msra.mxu0 0.0
  %213 = vmatprep.subr.mxu0 0.0
  %214 = vmatpush2.msra.mxu0 0.0
  %215 = vmatprep.subr.mxu0 0.0
  %216 = vmatpush2.msra.mxu0 0.0
  %217 = vmatprep.subr.mxu0 0.0
  %218 = vmatpush2.msra.mxu0 0.0
  %219 = vmatprep.subr.mxu0 0.0
  %220 = vmatpush2.msra.mxu0 0.0
  %221 = vmatprep.subr.mxu0 0.0
  %222 = vmatpush2.msra.mxu0 0.0
  %223 = vmatprep.subr.mxu0 0.0
  %224 = vmatpush2.msra.mxu0 0.0
  %225 = vmatprep.subr.mxu0 0.0
  %226 = vmatpush2.msra.mxu0 0.0
  %227 = vmatprep.subr.mxu0 0.0
  %228 = vmatpush2.msra.mxu0 0.0
  %229 = vmatprep.subr.mxu0 0.0
  %230 = vmatpush2.msra.mxu0 0.0
  %231 = vmatprep.mubr.f32.mxu0 0.0
  %232 = vmatmul.mubr.f32.gmra.mxu0 %v162
  %v233 = vpop.f32.mrf.mxu0
  %v234 = vadd.f32 %v159, %v233
  %v235 = vpop.f32.mrf.mxu0
  %236 = vmatprep.mubr.f32.mxu0 0.0
  %237 = vmatmul.mubr.f32.gmra.mxu0 %v165
  %v238 = vpop.f32.mrf.mxu0
  %v239 = vadd.f32 %v159, %v238
  %v240 = vpop.f32.mrf.mxu0
  %241 = vdwg.mxu0
  %vm242 = vcmask 326658
  %243 = vst.msk [vmem:[#allocation2 - $0x2] sm:$0xfc] %vm242, %v234
  %244 = vst.msk [vmem:[#allocation2 + $0x6] sm:$0xff] %vm160, %v239
  %vm245 = vcmask 320512
  %246 = vst.msk [vmem:[#allocation2 + $0xe] sm:$0x3] %vm245, 0.0
  %v247 = vld [vmem:[#allocation2] sm:$0xff]
  %v248 = vld [vmem:[#allocation2 + $0x8] sm:$0xff]
  %249 = vset.pattern.permute.xlu0 1
  %250 = vperm.xlu0 %249, %v45
  %v251 = vpop.permute.xlu0 %250
  %253 = vset.pattern.permute.xlu0 1
  %254 = vperm.xlu0 %253, %v46
  %v255 = vpop.permute.xlu0 %254
  %v257 = vmul.f32 %v251, %v247
  %v258 = vmul.f32 %v255, %v248
  %v259 = vadd.f32 %v149, %v257
  %v260 = vadd.f32 %v150, %v258
  %v261 = vmul.f32 %v149, %v149
  %v262 = vmul.f32 %v150, %v150
  %v263 = vmul.f32 %v257, %v257
  %v264 = vmul.f32 %v258, %v258
  %v265 = vadd.f32 %v261, %v263
  %v266 = vadd.f32 %v262, %v264
  %269 = vrot.lane.b32.xlu0 %v265, 120
  %v270 = vpop.permute.xlu0 %269
  %271 = vrot.lane.b32.xlu0 %v266, 120
  %v272 = vpop.permute.xlu0 %271
  %v275 = vadd.f32 %v265, %v270
  %v276 = vadd.f32 %v266, %v272
  %277 = vrot.lane.b32.xlu0 %v265, 112
  %v278 = vpop.permute.xlu0 %277
  %279 = vrot.lane.b32.xlu0 %v266, 112
  %v280 = vpop.permute.xlu0 %279
  %v283 = vadd.f32 %v275, %v278
  %v284 = vadd.f32 %v276, %v280
  %285 = vrot.lane.b32.xlu0 %v265, 104
  %v286 = vpop.permute.xlu0 %285
  %287 = vrot.lane.b32.xlu0 %v266, 104
  %v288 = vpop.permute.xlu0 %287
  %v291 = vadd.f32 %v283, %v286
  %v292 = vadd.f32 %v284, %v288
  %v293 = vld [vmem:[%s1] sm:$0xff]
  %v294 = vld [vmem:[%s1 + $0x8] sm:$0xff]
  %vm295 = vcmask 31744
  %v297 = vsel %vm295, %v293, 0
  %v300 = vsel %vm295, %v294, 0
  %vm302 = vcmask 1043456
  %v304 = vsel %vm302, %v42, 0
  %306 = vmatprep.subr.mxu0 0.0
  %307 = vmatpush1.msra.mxu0 0.0
  %308 = vmatprep.subr.mxu0 0.0
  %309 = vmatpush1.msra.mxu0 0.0
  %310 = vmatprep.subr.mxu0 0.0
  %311 = vmatpush1.msra.mxu0 0.0
  %312 = vmatprep.subr.mxu0 0.0
  %313 = vmatpush1.msra.mxu0 0.0
  %314 = vmatprep.subr.mxu0 0.0
  %315 = vmatpush1.msra.mxu0 0.0
  %316 = vmatprep.subr.mxu0 0.0
  %317 = vmatpush1.msra.mxu0 0.0
  %318 = vmatprep.subr.mxu0 0.0
  %319 = vmatpush1.msra.mxu0 0.0
  %320 = vmatprep.subr.mxu0 0.0
  %321 = vmatpush1.msra.mxu0 0.0
  %322 = vmatprep.subr.mxu0 0.0
  %323 = vmatpush1.msra.mxu0 0.0
  %324 = vmatprep.subr.mxu0 0.0
  %325 = vmatpush1.msra.mxu0 0.0
  %326 = vmatprep.subr.mxu0 0.0
  %327 = vmatpush1.msra.mxu0 0.0
  %328 = vmatprep.subr.mxu0 0.0
  %329 = vmatpush1.msra.mxu0 0.0
  %330 = vmatprep.subr.mxu0 0.0
  %331 = vmatpush1.msra.mxu0 0.0
  %332 = vmatprep.subr.mxu0 0.0
  %333 = vmatpush1.msra.mxu0 0.0
  %334 = vmatprep.subr.mxu0 0.0
  %335 = vmatpush1.msra.mxu0 0.0
  %336 = vmatprep.subr.mxu0 0.0
  %337 = vmatpush1.msra.mxu0 %v304
  %338 = vmatprep.subr.mxu0 0.0
  %339 = vmatpush2.msra.mxu0 0.0
  %340 = vmatprep.subr.mxu0 0.0
  %341 = vmatpush2.msra.mxu0 0.0
  %342 = vmatprep.subr.mxu0 0.0
  %343 = vmatpush2.msra.mxu0 0.0
  %344 = vmatprep.subr.mxu0 0.0
  %345 = vmatpush2.msra.mxu0 0.0
  %346 = vmatprep.subr.mxu0 0.0
  %347 = vmatpush2.msra.mxu0 0.0
  %348 = vmatprep.subr.mxu0 0.0
  %349 = vmatpush2.msra.mxu0 0.0
  %350 = vmatprep.subr.mxu0 0.0
  %351 = vmatpush2.msra.mxu0 0.0
  %352 = vmatprep.subr.mxu0 0.0
  %353 = vmatpush2.msra.mxu0 0.0
  %354 = vmatprep.subr.mxu0 0.0
  %355 = vmatpush2.msra.mxu0 0.0
  %356 = vmatprep.subr.mxu0 0.0
  %357 = vmatpush2.msra.mxu0 0.0
  %358 = vmatprep.subr.mxu0 0.0
  %359 = vmatpush2.msra.mxu0 0.0
  %360 = vmatprep.subr.mxu0 0.0
  %361 = vmatpush2.msra.mxu0 0.0
  %362 = vmatprep.subr.mxu0 0.0
  %363 = vmatpush2.msra.mxu0 0.0
  %364 = vmatprep.subr.mxu0 0.0
  %365 = vmatpush2.msra.mxu0 0.0
  %366 = vmatprep.subr.mxu0 0.0
  %367 = vmatpush2.msra.mxu0 0.0
  %368 = vmatprep.subr.mxu0 0.0
  %369 = vmatpush2.msra.mxu0 0.0
  %370 = vmatprep.mubr.f32.mxu0 0.0
  %371 = vmatmul.mubr.f32.gmra.mxu0 %v297
  %v372 = vpop.f32.mrf.mxu0
  %v373 = vadd.f32 0.0, %v372
  %v374 = vpop.f32.mrf.mxu0
  %375 = vmatprep.mubr.f32.mxu0 0.0
  %376 = vmatmul.mubr.f32.gmra.mxu0 %v300
  %v377 = vpop.f32.mrf.mxu0
  %v378 = vadd.f32 0.0, %v377
  %v379 = vpop.f32.mrf.mxu0
  %380 = vdwg.mxu0
  %v381 = vmax.f32 %v40, 0.0
  %vm382 = vcmp.ne.f32.partialorder %v40, %v40
  %v383 = vadd.f32 %v40, 0.0
  %v384 = vand.u32 2147483647, %v40
  %v385 = vsub.f32 0.0, %v384
  %v386 = vmul.f32 %v385, 1.442695
  %v387 = vpow.pop %v386
  %v388 = vadd.f32 %v387, 1.0
  %v389 = vlog2.pop %v388
  %v390 = vmul.f32 %v389, 0.6931472
  %v391 = vmul.f32 -0.5, %v387
  %v392 = vadd.f32 %v391, 1.0
  %v393 = vmul.f32 %v392, %v387
  %v394 = vand.u32 2147483647, %v387
  %vm395 = vcmp.lt.f32.partialorder %v394, 0.0004427343
  %v396 = vsel %vm395, %v393, %v390
  %v397 = vadd.f32 %v381, %v396
  %v398 = vsel %vm382, %v383, %v397
  %v399 = vrcp.pop %v398
  %v400 = vmul.f32 1.0, %v399
  %v401 = vlog2.pop %v398
  %v402 = vmul.f32 %v401, 0.6931472
  %v403 = vlaneseq
  %v404 = vshrl.u32 %v403, 7
  %v405 = vsub.s32 0, %v404
  %v406 = vrot.slane %v40, %v405
  %408 = vrot.lane.b32.xlu0 %v373, 24
  %v409 = vpop.permute.xlu0 %408
  %v411 = vadd.f32 %v406, %v409
  %v412 = vlaneseq
  %v413 = vshrl.u32 %v412, 7
  %v414 = vsub.s32 0, %v413
  %v415 = vrot.slane %v400, %v414
  %417 = vrot.lane.b32.xlu0 %v291, 8
  %v418 = vpop.permute.xlu0 %417
  %v420 = vadd.f32 %v415, %v418
  %v421 = vrcp.pop %v420
  %v422 = vmul.f32 1.0, %v421
  %424 = vrot.lane.b32.xlu0 %v411, 120
  %v425 = vpop.permute.xlu0 %424
  %v427 = vmul.f32 %v415, %v425
  %429 = vrot.lane.b32.xlu0 %v259, 16
  %v430 = vpop.permute.xlu0 %429
  %v432 = vadd.f32 %v427, %v430
  %v433 = vmul.f32 %v422, %v432
  %v434 = vlog2.pop %v422
  %v435 = vmul.f32 %v434, 0.6931472
  %v436 = vlaneseq
  %v437 = vshrl.u32 %v436, 7
  %v438 = vsub.s32 0, %v437
  %v439 = vrot.slane %v402, %v438
  %v440 = vsub.f32 %v439, %v435
  %v441 = vsub.f32 %v433, %v425
  %v442 = vmul.f32 %v441, %v441
  %v443 = vadd.f32 %v422, %v442
  %v444 = vlaneseq
  %v445 = vshrl.u32 %v444, 7
  %v446 = vsub.s32 0, %v445
  %v447 = vrot.slane %v398, %v446
  %v448 = vrcp.pop %v447
  %v449 = vmul.f32 %v443, %v448
  %v450 = vadd.f32 %v440, %v449
  %v451 = vsub.f32 %v450, 1.0
  %v452 = vmul.f32 %v451, 0.5
  %454 = vrot.lane.b32.xlu0 %v433, 112
  %v455 = vpop.permute.xlu0 %454
  %vm457 = vcmask 58368
  %458 = vst.msk [vmem:[%s11] sm:$0x3] %vm457, %v455
  %460 = vrot.lane.b32.xlu0 %v422, 112
  %v461 = vpop.permute.xlu0 %460
  %463 = vst.msk [vmem:[#allocation3] sm:$0x3] %vm457, %v461
  %465 = vrot.lane.b32.xlu0 %v452, 112
  %v466 = vpop.permute.xlu0 %465
  %468 = vst.msk [vmem:[#allocation4] sm:$0x3] %vm457, %v466
  %vm469 = vcmask 64512
  %v470 = vsel %vm469, %v455, 0
  %472 = vmatprep.subr.mxu0 0.0
  %473 = vmatpush1.msra.mxu0 0.0
  %474 = vmatprep.subr.mxu0 0.0
  %475 = vmatpush1.msra.mxu0 0.0
  %476 = vmatprep.subr.mxu0 0.0
  %477 = vmatpush1.msra.mxu0 0.0
  %478 = vmatprep.subr.mxu0 0.0
  %479 = vmatpush1.msra.mxu0 0.0
  %480 = vmatprep.subr.mxu0 0.0
  %481 = vmatpush1.msra.mxu0 0.0
  %482 = vmatprep.subr.mxu0 0.0
  %483 = vmatpush1.msra.mxu0 0.0
  %484 = vmatprep.subr.mxu0 0.0
  %485 = vmatpush1.msra.mxu0 0.0
  %486 = vmatprep.subr.mxu0 0.0
  %487 = vmatpush1.msra.mxu0 0.0
  %488 = vmatprep.subr.mxu0 0.0
  %489 = vmatpush1.msra.mxu0 0.0
  %490 = vmatprep.subr.mxu0 0.0
  %491 = vmatpush1.msra.mxu0 0.0
  %492 = vmatprep.subr.mxu0 0.0
  %493 = vmatpush1.msra.mxu0 0.0
  %494 = vmatprep.subr.mxu0 0.0
  %495 = vmatpush1.msra.mxu0 0.0
  %496 = vmatprep.subr.mxu0 0.0
  %497 = vmatpush1.msra.mxu0 0.0
  %498 = vmatprep.subr.mxu0 0.0
  %499 = vmatpush1.msra.mxu0 0.0
  %500 = vmatprep.subr.mxu0 0.0
  %501 = vmatpush1.msra.mxu0 0.0
  %502 = vmatprep.subr.mxu0 0.0
  %503 = vmatpush1.msra.mxu0 %v43
  %504 = vmatprep.subr.mxu0 0.0
  %505 = vmatpush2.msra.mxu0 0.0
  %506 = vmatprep.subr.mxu0 0.0
  %507 = vmatpush2.msra.mxu0 0.0
  %508 = vmatprep.subr.mxu0 0.0
  %509 = vmatpush2.msra.mxu0 0.0
  %510 = vmatprep.subr.mxu0 0.0
  %511 = vmatpush2.msra.mxu0 0.0
  %512 = vmatprep.subr.mxu0 0.0
  %513 = vmatpush2.msra.mxu0 0.0
  %514 = vmatprep.subr.mxu0 0.0
  %515 = vmatpush2.msra.mxu0 0.0
  %516 = vmatprep.subr.mxu0 0.0
  %517 = vmatpush2.msra.mxu0 0.0
  %518 = vmatprep.subr.mxu0 0.0
  %519 = vmatpush2.msra.mxu0 0.0
  %520 = vmatprep.subr.mxu0 0.0
  %521 = vmatpush2.msra.mxu0 0.0
  %522 = vmatprep.subr.mxu0 0.0
  %523 = vmatpush2.msra.mxu0 0.0
  %524 = vmatprep.subr.mxu0 0.0
  %525 = vmatpush2.msra.mxu0 0.0
  %526 = vmatprep.subr.mxu0 0.0
  %527 = vmatpush2.msra.mxu0 0.0
  %528 = vmatprep.subr.mxu0 0.0
  %529 = vmatpush2.msra.mxu0 0.0
  %530 = vmatprep.subr.mxu0 0.0
  %531 = vmatpush2.msra.mxu0 0.0
  %532 = vmatprep.subr.mxu0 0.0
  %533 = vmatpush2.msra.mxu0 0.0
  %534 = vmatprep.subr.mxu0 0.0
  %535 = vmatpush2.msra.mxu0 0.0
  %536 = vmatprep.mubr.f32.mxu0 0.0
  %537 = vmatmul.mubr.f32.gmra.mxu0 %v470
  %v538 = vpop.f32.mrf.mxu0
  %v539 = vadd.f32 %v406, %v538
  %v540 = vpop.f32.mrf.mxu0
  %541 = vdwg.mxu0
  %v542 = vtanh.pop %v539
  %v543 = vrot.slane %v373, 2
  %v545 = vadd.f32 %v542, %v543
  %v546 = vadd.f32 %v415, %v291
  %v547 = vrcp.pop %v546
  %v548 = vmul.f32 1.0, %v547
  %550 = vrot.lane.b32.xlu0 %v545, 8
  %v551 = vpop.permute.xlu0 %550
  %v553 = vmul.f32 %v415, %v551
  %v554 = vrot.slane %v259, 2
  %555 = vrot.lane.b32.xlu0 %v554, 8
  %v556 = vpop.permute.xlu0 %555
  %v558 = vadd.f32 %v553, %v556
  %v560 = vrot.slane %v558, 6
  %v562 = vmul.f32 %v548, %v560
  %v563 = vlog2.pop %v548
  %v564 = vmul.f32 %v563, 0.6931472
  %v565 = vsub.f32 %v439, %v564
  %v566 = vrot.slane %v545, 6
  %567 = vrot.lane.b32.xlu0 %v566, 8
  %v568 = vpop.permute.xlu0 %567
  %v570 = vsub.f32 %v562, %v568
  %v571 = vmul.f32 %v570, %v570
  %v572 = vadd.f32 %v548, %v571
  %v573 = vmul.f32 %v572, %v448
  %v574 = vadd.f32 %v565, %v573
  %v575 = vsub.f32 %v574, 1.0
  %v576 = vmul.f32 %v575, 0.5
  %578 = vrot.lane.b32.xlu0 %v562, 120
  %v579 = vpop.permute.xlu0 %578
  %vm581 = vcmask 60418
  %582 = vst.msk [vmem:[%s11] sm:$0xc] %vm581, %v579
  %584 = vrot.lane.b32.xlu0 %v548, 120
  %v585 = vpop.permute.xlu0 %584
  %587 = vst.msk [vmem:[#allocation3] sm:$0xc] %vm581, %v585
  %589 = vrot.lane.b32.xlu0 %v576, 120
  %v590 = vpop.permute.xlu0 %589
  %592 = vst.msk [vmem:[#allocation4] sm:$0xc] %vm581, %v590
  %v593 = vrot.slane %v562, 2
  %594 = vrot.lane.b32.xlu0 %v593, 120
  %v595 = vpop.permute.xlu0 %594
  %v596 = vsel %vm469, %v595, 0
  %598 = vmatprep.subr.mxu0 0.0
  %599 = vmatpush1.msra.mxu0 0.0
  %600 = vmatprep.subr.mxu0 0.0
  %601 = vmatpush1.msra.mxu0 0.0
  %602 = vmatprep.subr.mxu0 0.0
  %603 = vmatpush1.msra.mxu0 0.0
  %604 = vmatprep.subr.mxu0 0.0
  %605 = vmatpush1.msra.mxu0 0.0
  %606 = vmatprep.subr.mxu0 0.0
  %607 = vmatpush1.msra.mxu0 0.0
  %608 = vmatprep.subr.mxu0 0.0
  %609 = vmatpush1.msra.mxu0 0.0
  %610 = vmatprep.subr.mxu0 0.0
  %611 = vmatpush1.msra.mxu0 0.0
  %612 = vmatprep.subr.mxu0 0.0
  %613 = vmatpush1.msra.mxu0 0.0
  %614 = vmatprep.subr.mxu0 0.0
  %615 = vmatpush1.msra.mxu0 0.0
  %616 = vmatprep.subr.mxu0 0.0
  %617 = vmatpush1.msra.mxu0 0.0
  %618 = vmatprep.subr.mxu0 0.0
  %619 = vmatpush1.msra.mxu0 0.0
  %620 = vmatprep.subr.mxu0 0.0
  %621 = vmatpush1.msra.mxu0 0.0
  %622 = vmatprep.subr.mxu0 0.0
  %623 = vmatpush1.msra.mxu0 0.0
  %624 = vmatprep.subr.mxu0 0.0
  %625 = vmatpush1.msra.mxu0 0.0
  %626 = vmatprep.subr.mxu0 0.0
  %627 = vmatpush1.msra.mxu0 0.0
  %628 = vmatprep.subr.mxu0 0.0
  %629 = vmatpush1.msra.mxu0 %v43
  %630 = vmatprep.subr.mxu0 0.0
  %631 = vmatpush2.msra.mxu0 0.0
  %632 = vmatprep.subr.mxu0 0.0
  %633 = vmatpush2.msra.mxu0 0.0
  %634 = vmatprep.subr.mxu0 0.0
  %635 = vmatpush2.msra.mxu0 0.0
  %636 = vmatprep.subr.mxu0 0.0
  %637 = vmatpush2.msra.mxu0 0.0
  %638 = vmatprep.subr.mxu0 0.0
  %639 = vmatpush2.msra.mxu0 0.0
  %640 = vmatprep.subr.mxu0 0.0
  %641 = vmatpush2.msra.mxu0 0.0
  %642 = vmatprep.subr.mxu0 0.0
  %643 = vmatpush2.msra.mxu0 0.0
  %644 = vmatprep.subr.mxu0 0.0
  %645 = vmatpush2.msra.mxu0 0.0
  %646 = vmatprep.subr.mxu0 0.0
  %647 = vmatpush2.msra.mxu0 0.0
  %648 = vmatprep.subr.mxu0 0.0
  %649 = vmatpush2.msra.mxu0 0.0
  %650 = vmatprep.subr.mxu0 0.0
  %651 = vmatpush2.msra.mxu0 0.0
  %652 = vmatprep.subr.mxu0 0.0
  %653 = vmatpush2.msra.mxu0 0.0
  %654 = vmatprep.subr.mxu0 0.0
  %655 = vmatpush2.msra.mxu0 0.0
  %656 = vmatprep.subr.mxu0 0.0
  %657 = vmatpush2.msra.mxu0 0.0
  %658 = vmatprep.subr.mxu0 0.0
  %659 = vmatpush2.msra.mxu0 0.0
  %660 = vmatprep.subr.mxu0 0.0
  %661 = vmatpush2.msra.mxu0 0.0
  %662 = vmatprep.mubr.f32.mxu0 0.0
  %663 = vmatmul.mubr.f32.gmra.mxu0 %v596
  %v664 = vpop.f32.mrf.mxu0
  %v665 = vadd.f32 %v406, %v664
  %v666 = vpop.f32.mrf.mxu0
  %667 = vdwg.mxu0
  %v668 = vtanh.pop %v665
  %v669 = vrot.slane %v373, 4
  %v671 = vadd.f32 %v668, %v669
  %673 = vrot.lane.b32.xlu0 %v671, 8
  %v674 = vpop.permute.xlu0 %673
  %v676 = vmul.f32 %v415, %v674
  %v677 = vrot.slane %v259, 4
  %678 = vrot.lane.b32.xlu0 %v677, 8
  %v679 = vpop.permute.xlu0 %678
  %v681 = vadd.f32 %v676, %v679
  %v683 = vrot.slane %v681, 4
  %v685 = vmul.f32 %v548, %v683
  %v686 = vrot.slane %v671, 4
  %687 = vrot.lane.b32.xlu0 %v686, 8
  %v688 = vpop.permute.xlu0 %687
  %v690 = vsub.f32 %v685, %v688
  %v691 = vmul.f32 %v690, %v690
  %v692 = vadd.f32 %v548, %v691
  %v693 = vmul.f32 %v692, %v448
  %v694 = vadd.f32 %v565, %v693
  %v695 = vsub.f32 %v694, 1.0
  %v696 = vmul.f32 %v695, 0.5
  %698 = vrot.lane.b32.xlu0 %v685, 120
  %v699 = vpop.permute.xlu0 %698
  %vm701 = vcmask 62468
  %702 = vst.msk [vmem:[%s11] sm:$0x30] %vm701, %v699
  %703 = vst.msk [vmem:[#allocation3] sm:$0x30] %vm701, %v585
  %705 = vrot.lane.b32.xlu0 %v696, 120
  %v706 = vpop.permute.xlu0 %705
  %708 = vst.msk [vmem:[#allocation4] sm:$0x30] %vm701, %v706
  %v709 = vrot.slane %v685, 4
  %710 = vrot.lane.b32.xlu0 %v709, 120
  %v711 = vpop.permute.xlu0 %710
  %v712 = vsel %vm469, %v711, 0
  %714 = vmatprep.subr.mxu0 0.0
  %715 = vmatpush1.msra.mxu0 0.0
  %716 = vmatprep.subr.mxu0 0.0
  %717 = vmatpush1.msra.mxu0 0.0
  %718 = vmatprep.subr.mxu0 0.0
  %719 = vmatpush1.msra.mxu0 0.0
  %720 = vmatprep.subr.mxu0 0.0
  %721 = vmatpush1.msra.mxu0 0.0
  %722 = vmatprep.subr.mxu0 0.0
  %723 = vmatpush1.msra.mxu0 0.0
  %724 = vmatprep.subr.mxu0 0.0
  %725 = vmatpush1.msra.mxu0 0.0
  %726 = vmatprep.subr.mxu0 0.0
  %727 = vmatpush1.msra.mxu0 0.0
  %728 = vmatprep.subr.mxu0 0.0
  %729 = vmatpush1.msra.mxu0 0.0
  %730 = vmatprep.subr.mxu0 0.0
  %731 = vmatpush1.msra.mxu0 0.0
  %732 = vmatprep.subr.mxu0 0.0
  %733 = vmatpush1.msra.mxu0 0.0
  %734 = vmatprep.subr.mxu0 0.0
  %735 = vmatpush1.msra.mxu0 0.0
  %736 = vmatprep.subr.mxu0 0.0
  %737 = vmatpush1.msra.mxu0 0.0
  %738 = vmatprep.subr.mxu0 0.0
  %739 = vmatpush1.msra.mxu0 0.0
  %740 = vmatprep.subr.mxu0 0.0
  %741 = vmatpush1.msra.mxu0 0.0
  %742 = vmatprep.subr.mxu0 0.0
  %743 = vmatpush1.msra.mxu0 0.0
  %744 = vmatprep.subr.mxu0 0.0
  %745 = vmatpush1.msra.mxu0 %v43
  %746 = vmatprep.subr.mxu0 0.0
  %747 = vmatpush2.msra.mxu0 0.0
  %748 = vmatprep.subr.mxu0 0.0
  %749 = vmatpush2.msra.mxu0 0.0
  %750 = vmatprep.subr.mxu0 0.0
  %751 = vmatpush2.msra.mxu0 0.0
  %752 = vmatprep.subr.mxu0 0.0
  %753 = vmatpush2.msra.mxu0 0.0
  %754 = vmatprep.subr.mxu0 0.0
  %755 = vmatpush2.msra.mxu0 0.0
  %756 = vmatprep.subr.mxu0 0.0
  %757 = vmatpush2.msra.mxu0 0.0
  %758 = vmatprep.subr.mxu0 0.0
  %759 = vmatpush2.msra.mxu0 0.0
  %760 = vmatprep.subr.mxu0 0.0
  %761 = vmatpush2.msra.mxu0 0.0
  %762 = vmatprep.subr.mxu0 0.0
  %763 = vmatpush2.msra.mxu0 0.0
  %764 = vmatprep.subr.mxu0 0.0
  %765 = vmatpush2.msra.mxu0 0.0
  %766 = vmatprep.subr.mxu0 0.0
  %767 = vmatpush2.msra.mxu0 0.0
  %768 = vmatprep.subr.mxu0 0.0
  %769 = vmatpush2.msra.mxu0 0.0
  %770 = vmatprep.subr.mxu0 0.0
  %771 = vmatpush2.msra.mxu0 0.0
  %772 = vmatprep.subr.mxu0 0.0
  %773 = vmatpush2.msra.mxu0 0.0
  %774 = vmatprep.subr.mxu0 0.0
  %775 = vmatpush2.msra.mxu0 0.0
  %776 = vmatprep.subr.mxu0 0.0
  %777 = vmatpush2.msra.mxu0 0.0
  %778 = vmatprep.mubr.f32.mxu0 0.0
  %779 = vmatmul.mubr.f32.gmra.mxu0 %v712
  %v780 = vpop.f32.mrf.mxu0
  %v781 = vadd.f32 %v406, %v780
  %v782 = vpop.f32.mrf.mxu0
  %783 = vdwg.mxu0
  %v784 = vtanh.pop %v781
  %v785 = vrot.slane %v373, 6
  %v787 = vadd.f32 %v784, %v785
  %789 = vrot.lane.b32.xlu0 %v787, 8
  %v790 = vpop.permute.xlu0 %789
  %v792 = vmul.f32 %v415, %v790
  %v793 = vrot.slane %v259, 6
  %794 = vrot.lane.b32.xlu0 %v793, 8
  %v795 = vpop.permute.xlu0 %794
  %v797 = vadd.f32 %v792, %v795
  %v799 = vrot.slane %v797, 2
  %v801 = vmul.f32 %v548, %v799
  %v802 = vrot.slane %v787, 2
  %803 = vrot.lane.b32.xlu0 %v802, 8
  %v804 = vpop.permute.xlu0 %803
  %v806 = vsub.f32 %v801, %v804
  %v807 = vmul.f32 %v806, %v806
  %v808 = vadd.f32 %v548, %v807
  %v809 = vmul.f32 %v808, %v448
  %v810 = vadd.f32 %v565, %v809
  %v811 = vsub.f32 %v810, 1.0
  %v812 = vmul.f32 %v811, 0.5
  %814 = vrot.lane.b32.xlu0 %v801, 120
  %v815 = vpop.permute.xlu0 %814
  %vm817 = vcmask 64518
  %818 = vst.msk [vmem:[%s11] sm:$0xc0] %vm817, %v815
  %819 = vst.msk [vmem:[#allocation3] sm:$0xc0] %vm817, %v585
  %821 = vrot.lane.b32.xlu0 %v812, 120
  %v822 = vpop.permute.xlu0 %821
  %824 = vst.msk [vmem:[#allocation4] sm:$0xc0] %vm817, %v822
  %v825 = vrot.slane %v801, 6
  %826 = vrot.lane.b32.xlu0 %v825, 120
  %v827 = vpop.permute.xlu0 %826
  %v828 = vsel %vm469, %v827, 0
  %830 = vmatprep.subr.mxu0 0.0
  %831 = vmatpush1.msra.mxu0 0.0
  %832 = vmatprep.subr.mxu0 0.0
  %833 = vmatpush1.msra.mxu0 0.0
  %834 = vmatprep.subr.mxu0 0.0
  %835 = vmatpush1.msra.mxu0 0.0
  %836 = vmatprep.subr.mxu0 0.0
  %837 = vmatpush1.msra.mxu0 0.0
  %838 = vmatprep.subr.mxu0 0.0
  %839 = vmatpush1.msra.mxu0 0.0
  %840 = vmatprep.subr.mxu0 0.0
  %841 = vmatpush1.msra.mxu0 0.0
  %842 = vmatprep.subr.mxu0 0.0
  %843 = vmatpush1.msra.mxu0 0.0
  %844 = vmatprep.subr.mxu0 0.0
  %845 = vmatpush1.msra.mxu0 0.0
  %846 = vmatprep.subr.mxu0 0.0
  %847 = vmatpush1.msra.mxu0 0.0
  %848 = vmatprep.subr.mxu0 0.0
  %849 = vmatpush1.msra.mxu0 0.0
  %850 = vmatprep.subr.mxu0 0.0
  %851 = vmatpush1.msra.mxu0 0.0
  %852 = vmatprep.subr.mxu0 0.0
  %853 = vmatpush1.msra.mxu0 0.0
  %854 = vmatprep.subr.mxu0 0.0
  %855 = vmatpush1.msra.mxu0 0.0
  %856 = vmatprep.subr.mxu0 0.0
  %857 = vmatpush1.msra.mxu0 0.0
  %858 = vmatprep.subr.mxu0 0.0
  %859 = vmatpush1.msra.mxu0 0.0
  %860 = vmatprep.subr.mxu0 0.0
  %861 = vmatpush1.msra.mxu0 %v43
  %862 = vmatprep.subr.mxu0 0.0
  %863 = vmatpush2.msra.mxu0 0.0
  %864 = vmatprep.subr.mxu0 0.0
  %865 = vmatpush2.msra.mxu0 0.0
  %866 = vmatprep.subr.mxu0 0.0
  %867 = vmatpush2.msra.mxu0 0.0
  %868 = vmatprep.subr.mxu0 0.0
  %869 = vmatpush2.msra.mxu0 0.0
  %870 = vmatprep.subr.mxu0 0.0
  %871 = vmatpush2.msra.mxu0 0.0
  %872 = vmatprep.subr.mxu0 0.0
  %873 = vmatpush2.msra.mxu0 0.0
  %874 = vmatprep.subr.mxu0 0.0
  %875 = vmatpush2.msra.mxu0 0.0
  %876 = vmatprep.subr.mxu0 0.0
  %877 = vmatpush2.msra.mxu0 0.0
  %878 = vmatprep.subr.mxu0 0.0
  %879 = vmatpush2.msra.mxu0 0.0
  %880 = vmatprep.subr.mxu0 0.0
  %881 = vmatpush2.msra.mxu0 0.0
  %882 = vmatprep.subr.mxu0 0.0
  %883 = vmatpush2.msra.mxu0 0.0
  %884 = vmatprep.subr.mxu0 0.0
  %885 = vmatpush2.msra.mxu0 0.0
  %886 = vmatprep.subr.mxu0 0.0
  %887 = vmatpush2.msra.mxu0 0.0
  %888 = vmatprep.subr.mxu0 0.0
  %889 = vmatpush2.msra.mxu0 0.0
  %890 = vmatprep.subr.mxu0 0.0
  %891 = vmatpush2.msra.mxu0 0.0
  %892 = vmatprep.subr.mxu0 0.0
  %893 = vmatpush2.msra.mxu0 0.0
  %894 = vmatprep.mubr.f32.mxu0 0.0
  %895 = vmatmul.mubr.f32.gmra.mxu0 %v828
  %v896 = vpop.f32.mrf.mxu0
  %v897 = vadd.f32 %v406, %v896
  %v898 = vpop.f32.mrf.mxu0
  %899 = vdwg.mxu0
  %v900 = vtanh.pop %v897
  %v901 = vadd.f32 %v900, %v378
  %v902 = vadd.f32 %v415, %v292
  %v903 = vrcp.pop %v902
  %v904 = vmul.f32 1.0, %v903
  %906 = vrot.lane.b32.xlu0 %v901, 8
  %v907 = vpop.permute.xlu0 %906
  %v909 = vmul.f32 %v415, %v907
  %911 = vrot.lane.b32.xlu0 %v260, 8
  %v912 = vpop.permute.xlu0 %911
  %v914 = vadd.f32 %v909, %v912
  %v915 = vmul.f32 %v904, %v914
  %v916 = vlog2.pop %v904
  %v917 = vmul.f32 %v916, 0.6931472
  %v918 = vsub.f32 %v439, %v917
  %v919 = vsub.f32 %v915, %v907
  %v920 = vmul.f32 %v919, %v919
  %v921 = vadd.f32 %v904, %v920
  %v922 = vmul.f32 %v921, %v448
  %v923 = vadd.f32 %v918, %v922
  %v924 = vsub.f32 %v923, 1.0
  %v925 = vmul.f32 %v924, 0.5
  %927 = vrot.lane.b32.xlu0 %v915, 120
  %v928 = vpop.permute.xlu0 %927
  %930 = vst.msk [vmem:[%s11 + $0x8] sm:$0x3] %vm457, %v928
  %932 = vrot.lane.b32.xlu0 %v904, 120
  %v933 = vpop.permute.xlu0 %932
  %935 = vst.msk [vmem:[#allocation3 + $0x8] sm:$0x3] %vm457, %v933
  %937 = vrot.lane.b32.xlu0 %v925, 120
  %v938 = vpop.permute.xlu0 %937
  %940 = vst.msk [vmem:[#allocation4 + $0x8] sm:$0x3] %vm457, %v938
  %v941 = vsel %vm469, %v928, 0
  %943 = vmatprep.subr.mxu0 0.0
  %944 = vmatpush1.msra.mxu0 0.0
  %945 = vmatprep.subr.mxu0 0.0
  %946 = vmatpush1.msra.mxu0 0.0
  %947 = vmatprep.subr.mxu0 0.0
  %948 = vmatpush1.msra.mxu0 0.0
  %949 = vmatprep.subr.mxu0 0.0
  %950 = vmatpush1.msra.mxu0 0.0
  %951 = vmatprep.subr.mxu0 0.0
  %952 = vmatpush1.msra.mxu0 0.0
  %953 = vmatprep.subr.mxu0 0.0
  %954 = vmatpush1.msra.mxu0 0.0
  %955 = vmatprep.subr.mxu0 0.0
  %956 = vmatpush1.msra.mxu0 0.0
  %957 = vmatprep.subr.mxu0 0.0
  %958 = vmatpush1.msra.mxu0 0.0
  %959 = vmatprep.subr.mxu0 0.0
  %960 = vmatpush1.msra.mxu0 0.0
  %961 = vmatprep.subr.mxu0 0.0
  %962 = vmatpush1.msra.mxu0 0.0
  %963 = vmatprep.subr.mxu0 0.0
  %964 = vmatpush1.msra.mxu0 0.0
  %965 = vmatprep.subr.mxu0 0.0
  %966 = vmatpush1.msra.mxu0 0.0
  %967 = vmatprep.subr.mxu0 0.0
  %968 = vmatpush1.msra.mxu0 0.0
  %969 = vmatprep.subr.mxu0 0.0
  %970 = vmatpush1.msra.mxu0 0.0
  %971 = vmatprep.subr.mxu0 0.0
  %972 = vmatpush1.msra.mxu0 0.0
  %973 = vmatprep.subr.mxu0 0.0
  %974 = vmatpush1.msra.mxu0 %v43
  %975 = vmatprep.subr.mxu0 0.0
  %976 = vmatpush2.msra.mxu0 0.0
  %977 = vmatprep.subr.mxu0 0.0
  %978 = vmatpush2.msra.mxu0 0.0
  %979 = vmatprep.subr.mxu0 0.0
  %980 = vmatpush2.msra.mxu0 0.0
  %981 = vmatprep.subr.mxu0 0.0
  %982 = vmatpush2.msra.mxu0 0.0
  %983 = vmatprep.subr.mxu0 0.0
  %984 = vmatpush2.msra.mxu0 0.0
  %985 = vmatprep.subr.mxu0 0.0
  %986 = vmatpush2.msra.mxu0 0.0
  %987 = vmatprep.subr.mxu0 0.0
  %988 = vmatpush2.msra.mxu0 0.0
  %989 = vmatprep.subr.mxu0 0.0
  %990 = vmatpush2.msra.mxu0 0.0
  %991 = vmatprep.subr.mxu0 0.0
  %992 = vmatpush2.msra.mxu0 0.0
  %993 = vmatprep.subr.mxu0 0.0
  %994 = vmatpush2.msra.mxu0 0.0
  %995 = vmatprep.subr.mxu0 0.0
  %996 = vmatpush2.msra.mxu0 0.0
  %997 = vmatprep.subr.mxu0 0.0
  %998 = vmatpush2.msra.mxu0 0.0
  %999 = vmatprep.subr.mxu0 0.0
  %1000 = vmatpush2.msra.mxu0 0.0
  %1001 = vmatprep.subr.mxu0 0.0
  %1002 = vmatpush2.msra.mxu0 0.0
  %1003 = vmatprep.subr.mxu0 0.0
  %1004 = vmatpush2.msra.mxu0 0.0
  %1005 = vmatprep.subr.mxu0 0.0
  %1006 = vmatpush2.msra.mxu0 0.0
  %1007 = vmatprep.mubr.f32.mxu0 0.0
  %1008 = vmatmul.mubr.f32.gmra.mxu0 %v941
  %v1009 = vpop.f32.mrf.mxu0
  %v1010 = vadd.f32 %v406, %v1009
  %v1011 = vpop.f32.mrf.mxu0
  %1012 = vdwg.mxu0
  %v1013 = vtanh.pop %v1010
  %v1015 = vrot.slane %v378, 2
  %v1017 = vadd.f32 %v1013, %v1015
  %1019 = vrot.lane.b32.xlu0 %v1017, 8
  %v1020 = vpop.permute.xlu0 %1019
  %v1022 = vmul.f32 %v415, %v1020
  %v1023 = vrot.slane %v260, 2
  %1024 = vrot.lane.b32.xlu0 %v1023, 8
  %v1025 = vpop.permute.xlu0 %1024
  %v1027 = vadd.f32 %v1022, %v1025
  %v1029 = vrot.slane %v1027, 6
  %v1031 = vmul.f32 %v904, %v1029
  %v1032 = vrot.slane %v1017, 6
  %1033 = vrot.lane.b32.xlu0 %v1032, 8
  %v1034 = vpop.permute.xlu0 %1033
  %v1036 = vsub.f32 %v1031, %v1034
  %v1037 = vmul.f32 %v1036, %v1036
  %v1038 = vadd.f32 %v904, %v1037
  %v1039 = vmul.f32 %v1038, %v448
  %v1040 = vadd.f32 %v918, %v1039
  %v1041 = vsub.f32 %v1040, 1.0
  %v1042 = vmul.f32 %v1041, 0.5
  %1044 = vrot.lane.b32.xlu0 %v1031, 120
  %v1045 = vpop.permute.xlu0 %1044
  %1047 = vst.msk [vmem:[%s11 + $0x8] sm:$0xc] %vm581, %v1045
  %1048 = vst.msk [vmem:[#allocation3 + $0x8] sm:$0xc] %vm581, %v933
  %1050 = vrot.lane.b32.xlu0 %v1042, 120
  %v1051 = vpop.permute.xlu0 %1050
  %1053 = vst.msk [vmem:[#allocation4 + $0x8] sm:$0xc] %vm581, %v1051
  %v1054 = vrot.slane %v1031, 2
  %1055 = vrot.lane.b32.xlu0 %v1054, 120
  %v1056 = vpop.permute.xlu0 %1055
  %v1057 = vsel %vm469, %v1056, 0
  %1059 = vmatprep.subr.mxu0 0.0
  %1060 = vmatpush1.msra.mxu0 0.0
  %1061 = vmatprep.subr.mxu0 0.0
  %1062 = vmatpush1.msra.mxu0 0.0
  %1063 = vmatprep.subr.mxu0 0.0
  %1064 = vmatpush1.msra.mxu0 0.0
  %1065 = vmatprep.subr.mxu0 0.0
  %1066 = vmatpush1.msra.mxu0 0.0
  %1067 = vmatprep.subr.mxu0 0.0
  %1068 = vmatpush1.msra.mxu0 0.0
  %1069 = vmatprep.subr.mxu0 0.0
  %1070 = vmatpush1.msra.mxu0 0.0
  %1071 = vmatprep.subr.mxu0 0.0
  %1072 = vmatpush1.msra.mxu0 0.0
  %1073 = vmatprep.subr.mxu0 0.0
  %1074 = vmatpush1.msra.mxu0 0.0
  %1075 = vmatprep.subr.mxu0 0.0
  %1076 = vmatpush1.msra.mxu0 0.0
  %1077 = vmatprep.subr.mxu0 0.0
  %1078 = vmatpush1.msra.mxu0 0.0
  %1079 = vmatprep.subr.mxu0 0.0
  %1080 = vmatpush1.msra.mxu0 0.0
  %1081 = vmatprep.subr.mxu0 0.0
  %1082 = vmatpush1.msra.mxu0 0.0
  %1083 = vmatprep.subr.mxu0 0.0
  %1084 = vmatpush1.msra.mxu0 0.0
  %1085 = vmatprep.subr.mxu0 0.0
  %1086 = vmatpush1.msra.mxu0 0.0
  %1087 = vmatprep.subr.mxu0 0.0
  %1088 = vmatpush1.msra.mxu0 0.0
  %1089 = vmatprep.subr.mxu0 0.0
  %1090 = vmatpush1.msra.mxu0 %v43
  %1091 = vmatprep.subr.mxu0 0.0
  %1092 = vmatpush2.msra.mxu0 0.0
  %1093 = vmatprep.subr.mxu0 0.0
  %1094 = vmatpush2.msra.mxu0 0.0
  %1095 = vmatprep.subr.mxu0 0.0
  %1096 = vmatpush2.msra.mxu0 0.0
  %1097 = vmatprep.subr.mxu0 0.0
  %1098 = vmatpush2.msra.mxu0 0.0
  %1099 = vmatprep.subr.mxu0 0.0
  %1100 = vmatpush2.msra.mxu0 0.0
  %1101 = vmatprep.subr.mxu0 0.0
  %1102 = vmatpush2.msra.mxu0 0.0
  %1103 = vmatprep.subr.mxu0 0.0
  %1104 = vmatpush2.msra.mxu0 0.0
  %1105 = vmatprep.subr.mxu0 0.0
  %1106 = vmatpush2.msra.mxu0 0.0
  %1107 = vmatprep.subr.mxu0 0.0
  %1108 = vmatpush2.msra.mxu0 0.0
  %1109 = vmatprep.subr.mxu0 0.0
  %1110 = vmatpush2.msra.mxu0 0.0
  %1111 = vmatprep.subr.mxu0 0.0
  %1112 = vmatpush2.msra.mxu0 0.0
  %1113 = vmatprep.subr.mxu0 0.0
  %1114 = vmatpush2.msra.mxu0 0.0
  %1115 = vmatprep.subr.mxu0 0.0
  %1116 = vmatpush2.msra.mxu0 0.0
  %1117 = vmatprep.subr.mxu0 0.0
  %1118 = vmatpush2.msra.mxu0 0.0
  %1119 = vmatprep.subr.mxu0 0.0
  %1120 = vmatpush2.msra.mxu0 0.0
  %1121 = vmatprep.subr.mxu0 0.0
  %1122 = vmatpush2.msra.mxu0 0.0
  %1123 = vmatprep.mubr.f32.mxu0 0.0
  %1124 = vmatmul.mubr.f32.gmra.mxu0 %v1057
  %v1125 = vpop.f32.mrf.mxu0
  %v1126 = vadd.f32 %v406, %v1125
  %v1127 = vpop.f32.mrf.mxu0
  %1128 = vdwg.mxu0
  %v1129 = vtanh.pop %v1126
  %v1130 = vrot.slane %v378, 4
  %v1132 = vadd.f32 %v1129, %v1130
  %1134 = vrot.lane.b32.xlu0 %v1132, 8
  %v1135 = vpop.permute.xlu0 %1134
  %v1137 = vmul.f32 %v415, %v1135
  %v1138 = vrot.slane %v260, 4
  %1139 = vrot.lane.b32.xlu0 %v1138, 8
  %v1140 = vpop.permute.xlu0 %1139
  %v1142 = vadd.f32 %v1137, %v1140
  %v1144 = vrot.slane %v1142, 4
  %v1146 = vmul.f32 %v904, %v1144
  %v1147 = vrot.slane %v1132, 4
  %1148 = vrot.lane.b32.xlu0 %v1147, 8
  %v1149 = vpop.permute.xlu0 %1148
  %v1151 = vsub.f32 %v1146, %v1149
  %v1152 = vmul.f32 %v1151, %v1151
  %v1153 = vadd.f32 %v904, %v1152
  %v1154 = vmul.f32 %v1153, %v448
  %v1155 = vadd.f32 %v918, %v1154
  %v1156 = vsub.f32 %v1155, 1.0
  %v1157 = vmul.f32 %v1156, 0.5
  %1159 = vrot.lane.b32.xlu0 %v1146, 120
  %v1160 = vpop.permute.xlu0 %1159
  %1162 = vst.msk [vmem:[%s11 + $0x8] sm:$0x30] %vm701, %v1160
  %1163 = vst.msk [vmem:[#allocation3 + $0x8] sm:$0x30] %vm701, %v933
  %1165 = vrot.lane.b32.xlu0 %v1157, 120
  %v1166 = vpop.permute.xlu0 %1165
  %1168 = vst.msk [vmem:[#allocation4 + $0x8] sm:$0x30] %vm701, %v1166
  %v1169 = vrot.slane %v1146, 4
  %1170 = vrot.lane.b32.xlu0 %v1169, 120
  %v1171 = vpop.permute.xlu0 %1170
  %v1172 = vsel %vm469, %v1171, 0
  %1174 = vmatprep.subr.mxu0 0.0
  %1175 = vmatpush1.msra.mxu0 0.0
  %1176 = vmatprep.subr.mxu0 0.0
  %1177 = vmatpush1.msra.mxu0 0.0
  %1178 = vmatprep.subr.mxu0 0.0
  %1179 = vmatpush1.msra.mxu0 0.0
  %1180 = vmatprep.subr.mxu0 0.0
  %1181 = vmatpush1.msra.mxu0 0.0
  %1182 = vmatprep.subr.mxu0 0.0
  %1183 = vmatpush1.msra.mxu0 0.0
  %1184 = vmatprep.subr.mxu0 0.0
  %1185 = vmatpush1.msra.mxu0 0.0
  %1186 = vmatprep.subr.mxu0 0.0
  %1187 = vmatpush1.msra.mxu0 0.0
  %1188 = vmatprep.subr.mxu0 0.0
  %1189 = vmatpush1.msra.mxu0 0.0
  %1190 = vmatprep.subr.mxu0 0.0
  %1191 = vmatpush1.msra.mxu0 0.0
  %1192 = vmatprep.subr.mxu0 0.0
  %1193 = vmatpush1.msra.mxu0 0.0
  %1194 = vmatprep.subr.mxu0 0.0
  %1195 = vmatpush1.msra.mxu0 0.0
  %1196 = vmatprep.subr.mxu0 0.0
  %1197 = vmatpush1.msra.mxu0 0.0
  %1198 = vmatprep.subr.mxu0 0.0
  %1199 = vmatpush1.msra.mxu0 0.0
  %1200 = vmatprep.subr.mxu0 0.0
  %1201 = vmatpush1.msra.mxu0 0.0
  %1202 = vmatprep.subr.mxu0 0.0
  %1203 = vmatpush1.msra.mxu0 0.0
  %1204 = vmatprep.subr.mxu0 0.0
  %1205 = vmatpush1.msra.mxu0 %v43
  %1206 = vmatprep.subr.mxu0 0.0
  %1207 = vmatpush2.msra.mxu0 0.0
  %1208 = vmatprep.subr.mxu0 0.0
  %1209 = vmatpush2.msra.mxu0 0.0
  %1210 = vmatprep.subr.mxu0 0.0
  %1211 = vmatpush2.msra.mxu0 0.0
  %1212 = vmatprep.subr.mxu0 0.0
  %1213 = vmatpush2.msra.mxu0 0.0
  %1214 = vmatprep.subr.mxu0 0.0
  %1215 = vmatpush2.msra.mxu0 0.0
  %1216 = vmatprep.subr.mxu0 0.0
  %1217 = vmatpush2.msra.mxu0 0.0
  %1218 = vmatprep.subr.mxu0 0.0
  %1219 = vmatpush2.msra.mxu0 0.0
  %1220 = vmatprep.subr.mxu0 0.0
  %1221 = vmatpush2.msra.mxu0 0.0
  %1222 = vmatprep.subr.mxu0 0.0
  %1223 = vmatpush2.msra.mxu0 0.0
  %1224 = vmatprep.subr.mxu0 0.0
  %1225 = vmatpush2.msra.mxu0 0.0
  %1226 = vmatprep.subr.mxu0 0.0
  %1227 = vmatpush2.msra.mxu0 0.0
  %1228 = vmatprep.subr.mxu0 0.0
  %1229 = vmatpush2.msra.mxu0 0.0
  %1230 = vmatprep.subr.mxu0 0.0
  %1231 = vmatpush2.msra.mxu0 0.0
  %1232 = vmatprep.subr.mxu0 0.0
  %1233 = vmatpush2.msra.mxu0 0.0
  %1234 = vmatprep.subr.mxu0 0.0
  %1235 = vmatpush2.msra.mxu0 0.0
  %1236 = vmatprep.subr.mxu0 0.0
  %1237 = vmatpush2.msra.mxu0 0.0
  %1238 = vmatprep.mubr.f32.mxu0 0.0
  %1239 = vmatmul.mubr.f32.gmra.mxu0 %v1172
  %v1240 = vpop.f32.mrf.mxu0
  %v1241 = vadd.f32 %v406, %v1240
  %v1242 = vpop.f32.mrf.mxu0
  %1243 = vdwg.mxu0
  %v1244 = vtanh.pop %v1241
  %v1245 = vrot.slane %v378, 6
  %v1247 = vadd.f32 %v1244, %v1245
  %1249 = vrot.lane.b32.xlu0 %v1247, 8
  %v1250 = vpop.permute.xlu0 %1249
  %v1252 = vmul.f32 %v415, %v1250
  %v1253 = vrot.slane %v260, 6
  %1254 = vrot.lane.b32.xlu0 %v1253, 8
  %v1255 = vpop.permute.xlu0 %1254
  %v1257 = vadd.f32 %v1252, %v1255
  %v1259 = vrot.slane %v1257, 2
  %v1261 = vmul.f32 %v904, %v1259
  %v1262 = vrot.slane %v1247, 2
  %1263 = vrot.lane.b32.xlu0 %v1262, 8
  %v1264 = vpop.permute.xlu0 %1263
  %v1266 = vsub.f32 %v1261, %v1264
  %v1267 = vmul.f32 %v1266, %v1266
  %v1268 = vadd.f32 %v904, %v1267
  %v1269 = vmul.f32 %v1268, %v448
  %v1270 = vadd.f32 %v918, %v1269
  %v1271 = vsub.f32 %v1270, 1.0
  %v1272 = vmul.f32 %v1271, 0.5
  %1274 = vrot.lane.b32.xlu0 %v1261, 120
  %v1275 = vpop.permute.xlu0 %1274
  %1277 = vst.msk [vmem:[%s11 + $0x8] sm:$0xc0] %vm817, %v1275
  %1278 = vst.msk [vmem:[#allocation3 + $0x8] sm:$0xc0] %vm817, %v933
  %1280 = vrot.lane.b32.xlu0 %v1272, 120
  %v1281 = vpop.permute.xlu0 %1280
  %1283 = vst.msk [vmem:[#allocation4 + $0x8] sm:$0xc0] %vm817, %v1281
  %v1284 = vld [vmem:[%s11] sm:$0xff]
  %v1285 = vld [vmem:[%s11 + $0x8] sm:$0xff]
  %v1286 = vld [vmem:[#allocation3] sm:$0xff]
  %v1287 = vld [vmem:[#allocation3 + $0x8] sm:$0xff]
  %v1288 = vrsqrt.pop %v1286
  %v1289 = vmul.f32 %v1286, %v1288
  %vm1290 = vcmp.eq.f32.partialorder %v1286, inf
  %v1291 = vsel %vm1290, %v1286, %v1289
  %vm1292 = vcmp.eq.f32.partialorder %v1286, 0.0
  %v1293 = vand.u32 %v1286, 2147483648
  %v1294 = vsel %vm1292, %v1293, %v1291
  %v1295 = vrsqrt.pop %v1287
  %v1296 = vmul.f32 %v1287, %v1295
  %vm1297 = vcmp.eq.f32.partialorder %v1287, inf
  %v1298 = vsel %vm1297, %v1287, %v1296
  %vm1299 = vcmp.eq.f32.partialorder %v1287, 0.0
  %v1300 = vand.u32 %v1287, 2147483648
  %v1301 = vsel %vm1299, %v1300, %v1298
  %v1302 = vld [vmem:[%s4] sm:$0xff]
  %v1303 = vld [vmem:[%s4 + $0x8] sm:$0xff]
  %v1304 = vld [vmem:[%s4 + $0x10] sm:$0xff]
  %v1305 = vld [vmem:[%s4 + $0x18] sm:$0xff]
  %v1306 = vld [vmem:[%s4 + $0x20] sm:$0xff]
  %v1307 = vld [vmem:[%s4 + $0x28] sm:$0xff]
  %v1308 = vld [vmem:[%s4 + $0x30] sm:$0xff]
  %v1309 = vld [vmem:[%s4 + $0x38] sm:$0xff]
  %v1310 = vmul.f32 %v1294, %v1302
  %v1311 = vmul.f32 %v1301, %v1303
  %v1312 = vmul.f32 %v1294, %v1304
  %v1313 = vmul.f32 %v1301, %v1305
  %v1314 = vmul.f32 %v1294, %v1306
  %v1315 = vmul.f32 %v1301, %v1307
  %v1316 = vmul.f32 %v1294, %v1308
  %v1317 = vmul.f32 %v1301, %v1309
  %v1318 = vadd.f32 %v1284, %v1310
  %v1319 = vadd.f32 %v1285, %v1311
  %v1320 = vadd.f32 %v1284, %v1312
  %v1321 = vadd.f32 %v1285, %v1313
  %v1322 = vadd.f32 %v1284, %v1314
  %v1323 = vadd.f32 %v1285, %v1315
  %v1324 = vadd.f32 %v1284, %v1316
  %v1325 = vadd.f32 %v1285, %v1317
  %1326 = vst.msk [vmem:[%s10] sm:$0xff] %vm469, %v1318
  %1327 = vst.msk [vmem:[%s10 + $0x8] sm:$0xff] %vm469, %v1319
  %1328 = vst.msk [vmem:[%s10 + $0x10] sm:$0xff] %vm469, %v1320
  %1329 = vst.msk [vmem:[%s10 + $0x18] sm:$0xff] %vm469, %v1321
  %1330 = vst.msk [vmem:[%s10 + $0x20] sm:$0xff] %vm469, %v1322
  %1331 = vst.msk [vmem:[%s10 + $0x28] sm:$0xff] %vm469, %v1323
  %1332 = vst.msk [vmem:[%s10 + $0x30] sm:$0xff] %vm469, %v1324
  %1333 = vst.msk [vmem:[%s10 + $0x38] sm:$0xff] %vm469, %v1325
  %v1334 = vlaneseq
  %v1335 = vshrl.u32 %v1334, 7
  %v1336 = vsub.s32 0, %v1335
  %v1337 = vrot.slane %v41, %v1336
  %v1339 = vsel %vm469, %v1318, 0
  %v1342 = vsel %vm469, %v1319, 0
  %v1345 = vsel %vm469, %v1320, 0
  %v1348 = vsel %vm469, %v1321, 0
  %v1351 = vsel %vm469, %v1322, 0
  %v1354 = vsel %vm469, %v1323, 0
  %v1357 = vsel %vm469, %v1324, 0
  %v1360 = vsel %vm469, %v1325, 0
  %1362 = vmatprep.subr.mxu0 0.0
  %1363 = vmatpush1.msra.mxu0 0.0
  %1364 = vmatprep.subr.mxu0 0.0
  %1365 = vmatpush1.msra.mxu0 0.0
  %1366 = vmatprep.subr.mxu0 0.0
  %1367 = vmatpush1.msra.mxu0 0.0
  %1368 = vmatprep.subr.mxu0 0.0
  %1369 = vmatpush1.msra.mxu0 0.0
  %1370 = vmatprep.subr.mxu0 0.0
  %1371 = vmatpush1.msra.mxu0 0.0
  %1372 = vmatprep.subr.mxu0 0.0
  %1373 = vmatpush1.msra.mxu0 0.0
  %1374 = vmatprep.subr.mxu0 0.0
  %1375 = vmatpush1.msra.mxu0 0.0
  %1376 = vmatprep.subr.mxu0 0.0
  %1377 = vmatpush1.msra.mxu0 0.0
  %1378 = vmatprep.subr.mxu0 0.0
  %1379 = vmatpush1.msra.mxu0 0.0
  %1380 = vmatprep.subr.mxu0 0.0
  %1381 = vmatpush1.msra.mxu0 0.0
  %1382 = vmatprep.subr.mxu0 0.0
  %1383 = vmatpush1.msra.mxu0 0.0
  %1384 = vmatprep.subr.mxu0 0.0
  %1385 = vmatpush1.msra.mxu0 0.0
  %1386 = vmatprep.subr.mxu0 0.0
  %1387 = vmatpush1.msra.mxu0 0.0
  %1388 = vmatprep.subr.mxu0 0.0
  %1389 = vmatpush1.msra.mxu0 0.0
  %1390 = vmatprep.subr.mxu0 0.0
  %1391 = vmatpush1.msra.mxu0 0.0
  %1392 = vmatprep.subr.mxu0 0.0
  %1393 = vmatpush1.msra.mxu0 %v44
  %1394 = vmatprep.subr.mxu0 0.0
  %1395 = vmatpush2.msra.mxu0 0.0
  %1396 = vmatprep.subr.mxu0 0.0
  %1397 = vmatpush2.msra.mxu0 0.0
  %1398 = vmatprep.subr.mxu0 0.0
  %1399 = vmatpush2.msra.mxu0 0.0
  %1400 = vmatprep.subr.mxu0 0.0
  %1401 = vmatpush2.msra.mxu0 0.0
  %1402 = vmatprep.subr.mxu0 0.0
  %1403 = vmatpush2.msra.mxu0 0.0
  %1404 = vmatprep.subr.mxu0 0.0
  %1405 = vmatpush2.msra.mxu0 0.0
  %1406 = vmatprep.subr.mxu0 0.0
  %1407 = vmatpush2.msra.mxu0 0.0
  %1408 = vmatprep.subr.mxu0 0.0
  %1409 = vmatpush2.msra.mxu0 0.0
  %1410 = vmatprep.subr.mxu0 0.0
  %1411 = vmatpush2.msra.mxu0 0.0
  %1412 = vmatprep.subr.mxu0 0.0
  %1413 = vmatpush2.msra.mxu0 0.0
  %1414 = vmatprep.subr.mxu0 0.0
  %1415 = vmatpush2.msra.mxu0 0.0
  %1416 = vmatprep.subr.mxu0 0.0
  %1417 = vmatpush2.msra.mxu0 0.0
  %1418 = vmatprep.subr.mxu0 0.0
  %1419 = vmatpush2.msra.mxu0 0.0
  %1420 = vmatprep.subr.mxu0 0.0
  %1421 = vmatpush2.msra.mxu0 0.0
  %1422 = vmatprep.subr.mxu0 0.0
  %1423 = vmatpush2.msra.mxu0 0.0
  %1424 = vmatprep.subr.mxu0 0.0
  %1425 = vmatpush2.msra.mxu0 0.0
  %1426 = vmatprep.mubr.f32.mxu0 0.0
  %1427 = vmatmul.mubr.f32.gmra.mxu0 %v1339
  %v1428 = vpop.f32.mrf.mxu0
  %v1429 = vadd.f32 %v1337, %v1428
  %v1430 = vpop.f32.mrf.mxu0
  %1431 = vmatprep.mubr.f32.mxu0 0.0
  %1432 = vmatmul.mubr.f32.gmra.mxu0 %v1342
  %v1433 = vpop.f32.mrf.mxu0
  %v1434 = vadd.f32 %v1337, %v1433
  %v1435 = vpop.f32.mrf.mxu0
  %1436 = vmatprep.mubr.f32.mxu0 0.0
  %1437 = vmatmul.mubr.f32.gmra.mxu0 %v1345
  %v1438 = vpop.f32.mrf.mxu0
  %v1439 = vadd.f32 %v1337, %v1438
  %v1440 = vpop.f32.mrf.mxu0
  %1441 = vmatprep.mubr.f32.mxu0 0.0
  %1442 = vmatmul.mubr.f32.gmra.mxu0 %v1348
  %v1443 = vpop.f32.mrf.mxu0
  %v1444 = vadd.f32 %v1337, %v1443
  %v1445 = vpop.f32.mrf.mxu0
  %1446 = vmatprep.mubr.f32.mxu0 0.0
  %1447 = vmatmul.mubr.f32.gmra.mxu0 %v1351
  %v1448 = vpop.f32.mrf.mxu0
  %v1449 = vadd.f32 %v1337, %v1448
  %v1450 = vpop.f32.mrf.mxu0
  %1451 = vmatprep.mubr.f32.mxu0 0.0
  %1452 = vmatmul.mubr.f32.gmra.mxu0 %v1354
  %v1453 = vpop.f32.mrf.mxu0
  %v1454 = vadd.f32 %v1337, %v1453
  %v1455 = vpop.f32.mrf.mxu0
  %1456 = vmatprep.mubr.f32.mxu0 0.0
  %1457 = vmatmul.mubr.f32.gmra.mxu0 %v1357
  %v1458 = vpop.f32.mrf.mxu0
  %v1459 = vadd.f32 %v1337, %v1458
  %v1460 = vpop.f32.mrf.mxu0
  %1461 = vmatprep.mubr.f32.mxu0 0.0
  %1462 = vmatmul.mubr.f32.gmra.mxu0 %v1360
  %v1463 = vpop.f32.mrf.mxu0
  %v1464 = vadd.f32 %v1337, %v1463
  %v1465 = vpop.f32.mrf.mxu0
  %1466 = vdwg.mxu0
  %v1467 = vmul.f32 %v1429, 1.442695
  %v1468 = vpow.pop %v1467
  %v1469 = vmul.f32 %v1434, 1.442695
  %v1470 = vpow.pop %v1469
  %v1471 = vmul.f32 %v1439, 1.442695
  %v1472 = vpow.pop %v1471
  %v1473 = vmul.f32 %v1444, 1.442695
  %v1474 = vpow.pop %v1473
  %v1475 = vmul.f32 %v1449, 1.442695
  %v1476 = vpow.pop %v1475
  %v1477 = vmul.f32 %v1454, 1.442695
  %v1478 = vpow.pop %v1477
  %v1479 = vmul.f32 %v1459, 1.442695
  %v1480 = vpow.pop %v1479
  %v1481 = vmul.f32 %v1464, 1.442695
  %v1482 = vpow.pop %v1481
  %v1483 = vsel %vm57, %v1429, 0.0
  %v1484 = vsel %vm57, %v1439, 0.0
  %v1485 = vadd.f32 %v1483, %v1484
  %v1486 = vsel %vm57, %v1449, 0.0
  %v1487 = vadd.f32 %v1485, %v1486
  %v1488 = vsel %vm57, %v1459, 0.0
  %v1489 = vadd.f32 %v1487, %v1488
  %v1490 = vsel %vm57, %v1434, 0.0
  %v1491 = vsel %vm57, %v1444, 0.0
  %v1492 = vadd.f32 %v1490, %v1491
  %v1493 = vsel %vm57, %v1454, 0.0
  %v1494 = vadd.f32 %v1492, %v1493
  %v1495 = vsel %vm57, %v1464, 0.0
  %v1496 = vadd.f32 %v1494, %v1495
  %v1497 = vrcp.pop 4.0
  %v1498 = vmul.f32 %v1489, %v1497
  %v1499 = vmul.f32 %v1496, %v1497
  %v1500 = vsel %vm57, %v1468, 0.0
  %v1501 = vsel %vm57, %v1472, 0.0
  %v1502 = vadd.f32 %v1500, %v1501
  %v1503 = vsel %vm57, %v1476, 0.0
  %v1504 = vadd.f32 %v1502, %v1503
  %v1505 = vsel %vm57, %v1480, 0.0
  %v1506 = vadd.f32 %v1504, %v1505
  %v1507 = vsel %vm57, %v1470, 0.0
  %v1508 = vsel %vm57, %v1474, 0.0
  %v1509 = vadd.f32 %v1507, %v1508
  %v1510 = vsel %vm57, %v1478, 0.0
  %v1511 = vadd.f32 %v1509, %v1510
  %v1512 = vsel %vm57, %v1482, 0.0
  %v1513 = vadd.f32 %v1511, %v1512
  %v1514 = vmul.f32 %v1506, %v1497
  %v1515 = vmul.f32 %v1513, %v1497
  %v1516 = vld [vmem:[%s2] sm:$0xff]
  %v1517 = vld [vmem:[%s2 + $0x8] sm:$0xff]
  %v1518 = vmul.f32 %v1516, %v1498
  %v1519 = vmul.f32 %v1517, %v1499
  %v1520 = vsub.f32 %v1518, %v1514
  %v1521 = vsub.f32 %v1519, %v1515
  %v1522 = vld [vmem:[#allocation4] sm:$0xff]
  %v1523 = vld [vmem:[#allocation4 + $0x8] sm:$0xff]
  %v1524 = vsel %vm469, %v1522, 0.0
  %1525 = vadd.xlane.f32.xlu0 %v1524
  %v1526 = vpop.xlane.xlu0 %1525
  %v1527 = vsel %vm469, %v1523, 0.0
  %1528 = vadd.xlane.f32.xlu0 %v1527
  %v1529 = vpop.xlane.xlu0 %1528
  %vm1530 = vcmask 7168
  %1531 = vst.msk [vmem:[%s12] sm:$0xff] %vm1530, %v1526
  %1532 = vst.msk [vmem:[%s12 + $0x8] sm:$0xff] %vm1530, %v1529
  %v1533 = vsel %vm57, %v1520, 0.0
  %1534 = vadd.xlane.f32.xlu0 %v1533
  %v1535 = vpop.xlane.xlu0 %1534
  %v1536 = vsel %vm57, %v1521, 0.0
  %1537 = vadd.xlane.f32.xlu0 %v1536
  %v1538 = vpop.xlane.xlu0 %1537
  %vm1539 = vcmask 15368
  %1540 = vst.msk [vmem:[%s12] sm:$0xff] %vm1539, %v1535
  %1541 = vst.msk [vmem:[%s12 + $0x8] sm:$0xff] %vm1539, %v1538
  // Predicated region
  $region42: #{forward.3} parent=0 // pred_check
    _
  $region43: #{forward.3} parent=0 // pred_check_branch
    %1543 = sbr.rel (0) target = $region45
  $region44: #{forward.3} parent=0 // pred_region
    _
  $region45: #{forward.3} parent=0 // pred_fallthru
    _
  // Predicated region
  $region46: #{forward.3} parent=0 // pred_check
    _
  $region47: #{forward.3} parent=0 // pred_check_branch
    %1545 = sbr.rel (0) target = $region49
  $region48: #{forward.3} parent=0 // pred_region
    _
  $region49: #{forward.3} parent=0 // pred_fallthru
    _
  // Predicated region
  $region50: #{forward.3} parent=0 // pred_check
    _
  $region51: #{forward.3} parent=0 // pred_check_branch
    %1547 = sbr.rel (0) target = $region53
  $region52: #{forward.3} parent=0 // pred_region
    _
  $region53: #{forward.3} parent=0 // pred_fallthru
    _
  // Predicated region
  $region54: #{forward.3} parent=0 // pred_check
    _
  $region55: #{forward.3} parent=0 // pred_check_branch
    %1549 = sbr.rel (0) target = $region57
  $region56: #{forward.3} parent=0 // pred_region
    _
  $region57: #{forward.3} parent=0 // pred_fallthru
    _
  // Predicated region
  $region58: #{forward.3} parent=0 // pred_check
    _
  $region59: #{forward.3} parent=0 // pred_check_branch
    %1551 = sbr.rel (0) target = $region61
  $region60: #{forward.3} parent=0 // pred_region
    _
  $region61: #{forward.3} parent=0 // pred_fallthru
    _
  // Predicated region
  $region62: #{forward.3} parent=0 // pred_check
    _
  $region63: #{forward.3} parent=0 // pred_check_branch
    %1553 = sbr.rel (0) target = $region65
  $region64: #{forward.3} parent=0 // pred_region
    _
  $region65: #{forward.3} parent=0 // pred_fallthru
    _

</llo_original>
